<compile_context>
chip_gen: v5e
topology: v5e:2x2
jax: 0.10.0
libtpu: 0.0.40
codegen_flags: <defaults>
</compile_context>

<pallas_src>
import functools
import math

import jax
import jax.numpy as jnp
from jax import lax
from jax.experimental import pallas as pl
from jax.experimental.pallas import tpu as pltpu

D_MODEL = 576
N_HEADS = 9
N_KV_HEADS = 3
HEAD_DIM = D_MODEL // N_HEADS          # 64
N_REP = N_HEADS // N_KV_HEADS          # 3
KV_DIM = N_KV_HEADS * HEAD_DIM         # 192

NEG_INF = -1e30  # finite mask value: no exp(-inf + inf) NaN under tiled/online softmax


# --------------------- fused QKV projection (one launch) ---------------------
def _qkv_proj_kernel(x_ref, wq_ref, wk_ref, wv_ref, bq_ref, bk_ref, bv_ref,
                     q_ref, k_ref, v_ref):
    x = x_ref[...]                                           # (tm, d_model)
    q_ref[...] = (jnp.dot(x, wq_ref[...], preferred_element_type=jnp.float32)
                  + bq_ref[...]).astype(q_ref.dtype)
    k_ref[...] = (jnp.dot(x, wk_ref[...], preferred_element_type=jnp.float32)
                  + bk_ref[...]).astype(k_ref.dtype)
    v_ref[...] = (jnp.dot(x, wv_ref[...], preferred_element_type=jnp.float32)
                  + bv_ref[...]).astype(v_ref.dtype)


def qkv_projection(x, wq, wk, wv, bq, bk, bv, *, tm=None):
    """One pallas_call for Q/K/V: x is loaded once per tile; M axis is tiled + pipelined."""
    M, d_in = x.shape
    if tm is None:
        tm = M if M <= 512 else 512
    nm = pl.cdiv(M, tm)
    return pl.pallas_call(
        _qkv_proj_kernel,
        grid=(nm,),
        out_shape=(jax.ShapeDtypeStruct((M, D_MODEL), x.dtype),
                   jax.ShapeDtypeStruct((M, KV_DIM), x.dtype),
                   jax.ShapeDtypeStruct((M, KV_DIM), x.dtype)),
        in_specs=[
            pl.BlockSpec((tm, d_in), lambda i: (i, 0)),        # x tile (double-buffered)
            pl.BlockSpec((d_in, D_MODEL), lambda i: (0, 0)),   # weights stay VMEM-resident
            pl.BlockSpec((d_in, KV_DIM), lambda i: (0, 0)),
            pl.BlockSpec((d_in, KV_DIM), lambda i: (0, 0)),
            pl.BlockSpec((1, D_MODEL), lambda i: (0, 0)),
            pl.BlockSpec((1, KV_DIM), lambda i: (0, 0)),
            pl.BlockSpec((1, KV_DIM), lambda i: (0, 0)),
        ],
        out_specs=(
            pl.BlockSpec((tm, D_MODEL), lambda i: (i, 0)),
            pl.BlockSpec((tm, KV_DIM), lambda i: (i, 0)),
            pl.BlockSpec((tm, KV_DIM), lambda i: (i, 0)),
        ),
        compiler_params=pltpu.CompilerParams(dimension_semantics=("parallel",)),
        # no K-reduction grid axis -> unconditional bias add is correct here
    )(x, wq, wk, wv, bq.reshape(1, -1), bk.reshape(1, -1), bv.reshape(1, -1))


# ------------- flash-style GQA attention fused with output projection --------------
def _gqa_attn_kernel(q_ref, k_ref, v_ref, wo_ref, bo_ref, o_ref,
                     qs_ref, acc_ref, m_ref, l_ref, *, tq, tk, scale):
    qt = pl.program_id(1)
    kt = pl.program_id(2)
    n_kv = pl.num_programs(2)

    @pl.when(kt == 0)
    def _init():
        # Restack the N_REP query heads of each KV group along rows ONCE per Q tile:
        # every kv step then runs one tall (n_rep*tq, hd) x (hd, tk) matmul per group
        # instead of N_REP skinny ones.  Scale folded in here.
        q = q_ref[...] * scale                               # (tq, n_heads*hd)
        for g in range(N_KV_HEADS):
            for r in range(N_REP):
                h = g * N_REP + r
                qs_ref[g, r * tq:(r + 1) * tq, :] = q[:, h * HEAD_DIM:(h + 1) * HEAD_DIM]
        m_ref[...] = jnp.full_like(m_ref, NEG_INF)
        l_ref[...] = jnp.zeros_like(l_ref)
        acc_ref[...] = jnp.zeros_like(acc_ref)

    # Skip compute for KV tiles entirely above the causal diagonal of this Q tile.
    @pl.when(kt * tk <= qt * tq + (tq - 1))
    def _compute():
        k = k_ref[...]                                       # (tk, n_kv_heads*hd)
        v = v_ref[...]

        q_pos = qt * tq + lax.broadcasted_iota(jnp.int32, (tq, tk), 0)
        k_pos = kt * tk + lax.broadcasted_iota(jnp.int32, (tq, tk), 1)
        masked = k_pos > q_pos                               # shared across all heads
        masked3 = jnp.concatenate([masked] * N_REP, axis=0)  # (n_rep*tq, tk)

        for g in range(N_KV_HEADS):
            # K/V tile for this group: one DMA, reused by its N_REP stacked query heads.
            kg = k[:, g * HEAD_DIM:(g + 1) * HEAD_DIM]       # (tk, hd)
            vg = v[:, g * HEAD_DIM:(g + 1) * HEAD_DIM]       # (tk, hd)
            qg = qs_ref[g]                                   # (n_rep*tq, hd), pre-scaled

            # contract head_dim of both operands -> no explicit K transpose
            s = lax.dot_general(qg, kg, (((1,), (1,)), ((), ())),
                                preferred_element_type=jnp.float32)
            s = jnp.where(masked3, NEG_INF, s)               # (n_rep*tq, tk)

            m_prev = m_ref[g]                                # (n_rep*tq, 1)
            m_new = jnp.maximum(m_prev, jnp.max(s, axis=-1, keepdims=True))
            alpha = jnp.exp(m_prev - m_new)
            p = jnp.exp(s - m_new)
            l_ref[g] = alpha * l_ref[g] + jnp.sum(p, axis=-1, keepdims=True)
            acc_ref[g] = alpha * acc_ref[g] + lax.dot_general(
                p, vg, (((1,), (0,)), ((), ())), preferred_element_type=jnp.float32)
            m_ref[g] = m_new

    @pl.when(kt == n_kv - 1)
    def _finalize():
        # Un-stack back to head-major columns, then do the output projection in-kernel:
        # single lane-dense (tq, d_model) operand, deep 576-contraction MXU matmul, and
        # the attention output never round-trips through HBM.
        cols = []
        for g in range(N_KV_HEADS):
            inv = pl.reciprocal(l_ref[g], approx=True)       # EUP slot, ~free
            og = acc_ref[g] * inv                            # (n_rep*tq, hd)
            for r in range(N_REP):
                cols.append(og[r * tq:(r + 1) * tq, :])
        attn = jnp.concatenate(cols, axis=-1)                # (tq, d_model)
        out = jnp.dot(attn, wo_ref[...], preferred_element_type=jnp.float32) + bo_ref[...]
        o_ref[...] = out.astype(o_ref.dtype)


def gqa_attention_out_proj(q, k, v, wo, bo, *, tq=None, tk=None):
    """q: (B,S,n_heads*hd); k,v: (B,S,n_kv_heads*hd); returns fc_out(attention) (B,S,d_model)."""
    B, S, _ = q.shape
    if tq is None:
        tq = S if S <= 256 else 256
    if tk is None:
        tk = S if S <= 512 else 512
    nq = pl.cdiv(S, tq)
    nk = pl.cdiv(S, tk)
    scale = 1.0 / math.sqrt(HEAD_DIM)
    kernel = functools.partial(_gqa_attn_kernel, tq=tq, tk=tk, scale=scale)

    def kv_index_map(b, qi, ki):
        # Clamp the kv block index to the last causally-needed tile: tiles fully above
        # the diagonal keep the same block index -> Pallas skips their HBM DMAs entirely.
        last_needed = (qi * tq + tq - 1) // tk
        return (b, jnp.minimum(ki, last_needed), 0)

    return pl.pallas_call(
        kernel,
        grid=(B, nq, nk),
        out_shape=jax.ShapeDtypeStruct((B, S, D_MODEL), q.dtype),
        in_specs=[
            pl.BlockSpec((None, tq, D_MODEL), lambda b, qi, ki: (b, qi, 0)),
            pl.BlockSpec((None, tk, KV_DIM), kv_index_map),
            pl.BlockSpec((None, tk, KV_DIM), kv_index_map),
            pl.BlockSpec((D_MODEL, D_MODEL), lambda b, qi, ki: (0, 0)),  # wo resident
            pl.BlockSpec((1, D_MODEL), lambda b, qi, ki: (0, 0)),        # bo resident
        ],
        out_specs=pl.BlockSpec((None, tq, D_MODEL), lambda b, qi, ki: (b, qi, 0)),
        scratch_shapes=[
            pltpu.VMEM((N_KV_HEADS, N_REP * tq, HEAD_DIM), jnp.float32),  # stacked, scaled Q
            pltpu.VMEM((N_KV_HEADS, N_REP * tq, HEAD_DIM), jnp.float32),  # accumulator
            pltpu.VMEM((N_KV_HEADS, N_REP * tq, 1), jnp.float32),         # running max
            pltpu.VMEM((N_KV_HEADS, N_REP * tq, 1), jnp.float32),         # running denom
        ],
        compiler_params=pltpu.CompilerParams(
            dimension_semantics=("parallel", "parallel", "arbitrary")),
    )(q, k, v, wo, bo.reshape(1, D_MODEL))


# ------------------------------ module forward --------------------------------
def init_params(key):
    """Deterministic synthetic params (torch Linear shapes, stored as (in, out))."""
    ks = jax.random.split(key, 8)
    s = 0.02
    return {
        "wq": jax.random.normal(ks[0], (D_MODEL, D_MODEL), jnp.float32) * s,
        "bq": jax.random.normal(ks[1], (D_MODEL,), jnp.float32) * s,
        "wk": jax.random.normal(ks[2], (D_MODEL, KV_DIM), jnp.float32) * s,
        "bk": jax.random.normal(ks[3], (KV_DIM,), jnp.float32) * s,
        "wv": jax.random.normal(ks[4], (D_MODEL, KV_DIM), jnp.float32) * s,
        "bv": jax.random.normal(ks[5], (KV_DIM,), jnp.float32) * s,
        "wo": jax.random.normal(ks[6], (D_MODEL, D_MODEL), jnp.float32) * s,
        "bo": jax.random.normal(ks[7], (D_MODEL,), jnp.float32) * s,
    }


def multi_head_attention(params, x):
    B, S, D = x.shape
    x2 = x.reshape(B * S, D)

    # Q/K/V in one launch; outputs stay in (B, S, heads*head_dim) layout -> no transposes.
    q2, k2, v2 = qkv_projection(x2, params["wq"], params["wk"], params["wv"],
                                params["bq"], params["bk"], params["bv"])
    q = q2.reshape(B, S, D_MODEL)
    k = k2.reshape(B, S, KV_DIM)
    v = v2.reshape(B, S, KV_DIM)

    # attention + fc_out fused: attention output never written to HBM.
    return gqa_attention_out_proj(q, k, v, params["wo"], params["bo"])

    # TODO(synk): optional bf16 cast of activations/weights for the MXU (largest win on v5e);
    # kept f32 to match the f32 reference within tolerance.


# ---------------------------- pure-JAX reference -------------------------------
def reference(params, x):
    B, S, D = x.shape
    q = (x @ params["wq"] + params["bq"]).reshape(B, S, N_HEADS, HEAD_DIM).transpose(0, 2, 1, 3)
    k = (x @ params["wk"] + params["bk"]).reshape(B, S, N_KV_HEADS, HEAD_DIM).transpose(0, 2, 1, 3)
    v = (x @ params["wv"] + params["bv"]).reshape(B, S, N_KV_HEADS, HEAD_DIM).transpose(0, 2, 1, 3)
    k = jnp.repeat(k, N_REP, axis=1)
    v = jnp.repeat(v, N_REP, axis=1)
    s = jnp.einsum("bhqd,bhkd->bhqk", q, k) / math.sqrt(HEAD_DIM)
    mask = jnp.triu(jnp.ones((S, S), bool), k=1)
    s = jnp.where(mask, -jnp.inf, s)
    w = jax.nn.softmax(s, axis=-1)
    o = jnp.einsum("bhqk,bhkd->bhqd", w, v)
    o = o.transpose(0, 2, 1, 3).reshape(B, S, D)
    return o @ params["wo"] + params["bo"]


if __name__ == "__main__":
    key = jax.random.PRNGKey(0)
    pkey, xkey = jax.random.split(key)
    params = init_params(pkey)

    B, S = 2, 8
    x = jax.random.normal(xkey, (B, S, D_MODEL), jnp.float32)

    out = multi_head_attention(params, x)
    out = jax.block_until_ready(out)

    ref = reference(params, x)
    assert out.shape == (B, S, D_MODEL)
    assert jnp.allclose(out, ref, atol=5e-2, rtol=5e-2), "mismatch vs reference"

    print("KERNEL_OK")
</pallas_src>

<mosaic_0001>
module attributes {stable_mosaic.version = 11 : i64} {
  func.func @_qkv_proj_kernel(%arg0: i32, %arg1: memref<16x576xf32, #tpu.memory_space<vmem>>, %arg2: memref<576x576xf32, #tpu.memory_space<vmem>>, %arg3: memref<576x192xf32, #tpu.memory_space<vmem>>, %arg4: memref<576x192xf32, #tpu.memory_space<vmem>>, %arg5: memref<1x576xf32, #tpu.memory_space<vmem>>, %arg6: memref<1x192xf32, #tpu.memory_space<vmem>>, %arg7: memref<1x192xf32, #tpu.memory_space<vmem>>, %arg8: memref<16x576xf32, #tpu.memory_space<vmem>>, %arg9: memref<16x192xf32, #tpu.memory_space<vmem>>, %arg10: memref<16x192xf32, #tpu.memory_space<vmem>>) attributes {dimension_semantics = [#tpu.dimension_semantics<parallel>], iteration_bounds = array<i64: 1>, scalar_prefetch = 0 : i64, scratch_operands = 0 : i64, tpu.core_type = #tpu.core_type<tc>, window_params = [{transform_indices = @transform_0, window_bounds = array<i64: 16, 576>}, {pipeline_mode = #tpu.pipeline_mode<synchronous>, transform_indices = @transform_1, window_bounds = array<i64: 576, 576>}, {pipeline_mode = #tpu.pipeline_mode<synchronous>, transform_indices = @transform_2, window_bounds = array<i64: 576, 192>}, {pipeline_mode = #tpu.pipeline_mode<synchronous>, transform_indices = @transform_3, window_bounds = array<i64: 576, 192>}, {pipeline_mode = #tpu.pipeline_mode<synchronous>, transform_indices = @transform_4, window_bounds = array<i64: 1, 576>}, {pipeline_mode = #tpu.pipeline_mode<synchronous>, transform_indices = @transform_5, window_bounds = array<i64: 1, 192>}, {pipeline_mode = #tpu.pipeline_mode<synchronous>, transform_indices = @transform_6, window_bounds = array<i64: 1, 192>}, {transform_indices = @transform_7, window_bounds = array<i64: 16, 576>}, {transform_indices = @transform_8, window_bounds = array<i64: 16, 192>}, {transform_indices = @transform_9, window_bounds = array<i64: 16, 192>}]} {
    %c0 = arith.constant 0 : index
    %c0_0 = arith.constant 0 : index
    %0 = vector.load %arg1[%c0, %c0_0] : memref<16x576xf32, #tpu.memory_space<vmem>>, vector<16x576xf32>
    %c0_1 = arith.constant 0 : index
    %c0_2 = arith.constant 0 : index
    %1 = vector.load %arg2[%c0_1, %c0_2] : memref<576x576xf32, #tpu.memory_space<vmem>>, vector<576x576xf32>
    %cst = arith.constant dense<0.000000e+00> : vector<16x576xf32>
    %2 = tpu.matmul %0, %1, %cst {dimension_numbers = #tpu.dot_dimension_numbers<[1], [0], [0], [1], [0, 0, 1, 1], [], []>} : vector<16x576xf32>, vector<576x576xf32>, vector<16x576xf32> -> vector<16x576xf32>
    %c0_3 = arith.constant 0 : index
    %c0_4 = arith.constant 0 : index
    %3 = vector.load %arg5[%c0_3, %c0_4] : memref<1x576xf32, #tpu.memory_space<vmem>>, vector<1x576xf32>
    %4 = vector.broadcast %3 : vector<1x576xf32> to vector<16x576xf32>
    %5 = arith.addf %2, %4 : vector<16x576xf32>
    %c0_5 = arith.constant 0 : index
    %c0_6 = arith.constant 0 : index
    %6 = vector.load %arg8[%c0_5, %c0_6] : memref<16x576xf32, #tpu.memory_space<vmem>>, vector<16x576xf32>
    tpu.vector_store %arg8[%c0_5, %c0_6], %5 {strides = array<i32>} : memref<16x576xf32, #tpu.memory_space<vmem>>, vector<16x576xf32>,
    %c0_7 = arith.constant 0 : index
    %c0_8 = arith.constant 0 : index
    %7 = vector.load %arg3[%c0_7, %c0_8] : memref<576x192xf32, #tpu.memory_space<vmem>>, vector<576x192xf32>
    %cst_9 = arith.constant dense<0.000000e+00> : vector<16x192xf32>
    %8 = tpu.matmul %0, %7, %cst_9 {dimension_numbers = #tpu.dot_dimension_numbers<[1], [0], [0], [1], [0, 0, 1, 1], [], []>} : vector<16x576xf32>, vector<576x192xf32>, vector<16x192xf32> -> vector<16x192xf32>
    %c0_10 = arith.constant 0 : index
    %c0_11 = arith.constant 0 : index
    %9 = vector.load %arg6[%c0_10, %c0_11] : memref<1x192xf32, #tpu.memory_space<vmem>>, vector<1x192xf32>
    %10 = vector.broadcast %9 : vector<1x192xf32> to vector<16x192xf32>
    %11 = arith.addf %8, %10 : vector<16x192xf32>
    %c0_12 = arith.constant 0 : index
    %c0_13 = arith.constant 0 : index
    %12 = vector.load %arg9[%c0_12, %c0_13] : memref<16x192xf32, #tpu.memory_space<vmem>>, vector<16x192xf32>
    tpu.vector_store %arg9[%c0_12, %c0_13], %11 {strides = array<i32>} : memref<16x192xf32, #tpu.memory_space<vmem>>, vector<16x192xf32>,
    %c0_14 = arith.constant 0 : index
    %c0_15 = arith.constant 0 : index
    %13 = vector.load %arg4[%c0_14, %c0_15] : memref<576x192xf32, #tpu.memory_space<vmem>>, vector<576x192xf32>
    %cst_16 = arith.constant dense<0.000000e+00> : vector<16x192xf32>
    %14 = tpu.matmul %0, %13, %cst_16 {dimension_numbers = #tpu.dot_dimension_numbers<[1], [0], [0], [1], [0, 0, 1, 1], [], []>} : vector<16x576xf32>, vector<576x192xf32>, vector<16x192xf32> -> vector<16x192xf32>
    %c0_17 = arith.constant 0 : index
    %c0_18 = arith.constant 0 : index
    %15 = vector.load %arg7[%c0_17, %c0_18] : memref<1x192xf32, #tpu.memory_space<vmem>>, vector<1x192xf32>
    %16 = vector.broadcast %15 : vector<1x192xf32> to vector<16x192xf32>
    %17 = arith.addf %14, %16 : vector<16x192xf32>
    %c0_19 = arith.constant 0 : index
    %c0_20 = arith.constant 0 : index
    %18 = vector.load %arg10[%c0_19, %c0_20] : memref<16x192xf32, #tpu.memory_space<vmem>>, vector<16x192xf32>
    tpu.vector_store %arg10[%c0_19, %c0_20], %17 {strides = array<i32>} : memref<16x192xf32, #tpu.memory_space<vmem>>, vector<16x192xf32>,
    return
  }
  func.func @transform_0(%arg0: i32) -> (i32, i32) {
    %c0_i32 = arith.constant 0 : i32
    %c0_i32_0 = arith.constant 0 : i32
    return %arg0, %c0_i32 : i32, i32
  }
  func.func @transform_1(%arg0: i32) -> (i32, i32) {
    %c0_i32 = arith.constant 0 : i32
    %c0_i32_0 = arith.constant 0 : i32
    %c0_i32_1 = arith.constant 0 : i32
    return %c0_i32, %c0_i32_0 : i32, i32
  }
  func.func @transform_2(%arg0: i32) -> (i32, i32) {
    %c0_i32 = arith.constant 0 : i32
    %c0_i32_0 = arith.constant 0 : i32
    %c0_i32_1 = arith.constant 0 : i32
    return %c0_i32, %c0_i32_0 : i32, i32
  }
  func.func @transform_3(%arg0: i32) -> (i32, i32) {
    %c0_i32 = arith.constant 0 : i32
    %c0_i32_0 = arith.constant 0 : i32
    %c0_i32_1 = arith.constant 0 : i32
    return %c0_i32, %c0_i32_0 : i32, i32
  }
  func.func @transform_4(%arg0: i32) -> (i32, i32) {
    %c0_i32 = arith.constant 0 : i32
    %c0_i32_0 = arith.constant 0 : i32
    %c0_i32_1 = arith.constant 0 : i32
    return %c0_i32, %c0_i32_0 : i32, i32
  }
  func.func @transform_5(%arg0: i32) -> (i32, i32) {
    %c0_i32 = arith.constant 0 : i32
    %c0_i32_0 = arith.constant 0 : i32
    %c0_i32_1 = arith.constant 0 : i32
    return %c0_i32, %c0_i32_0 : i32, i32
  }
  func.func @transform_6(%arg0: i32) -> (i32, i32) {
    %c0_i32 = arith.constant 0 : i32
    %c0_i32_0 = arith.constant 0 : i32
    %c0_i32_1 = arith.constant 0 : i32
    return %c0_i32, %c0_i32_0 : i32, i32
  }
  func.func @transform_7(%arg0: i32) -> (i32, i32) {
    %c0_i32 = arith.constant 0 : i32
    %c0_i32_0 = arith.constant 0 : i32
    return %arg0, %c0_i32 : i32, i32
  }
  func.func @transform_8(%arg0: i32) -> (i32, i32) {
    %c0_i32 = arith.constant 0 : i32
    %c0_i32_0 = arith.constant 0 : i32
    return %arg0, %c0_i32 : i32, i32
  }
  func.func @transform_9(%arg0: i32) -> (i32, i32) {
    %c0_i32 = arith.constant 0 : i32
    %c0_i32_0 = arith.constant 0 : i32
    return %arg0, %c0_i32 : i32, i32
  }
}

</mosaic_0001>

<llo_original>
// kernel: tpu_custom_call.1
$region0: #{tpu_custom_call.1}
  #allocation0 [shape = 'u32[]', space=smem, size = 0x4, offset = 0x4, fixed_abs, tag = 'smem constant byte address 0x4 - core index']
  #allocation1 [shape = 'u32[72,128]{1,0:T(1,128)}', space=vmem, size = 0x9000, scoped, tag = 'internal scratch']
  %s0 = inlined_call_operand.vmem [shape: f32[16,576], index: 0, kind: input, shape index: {}]
  %s1 = inlined_call_operand.vmem [shape: f32[576,576], index: 1, kind: input, shape index: {}]
  %s2 = inlined_call_operand.vmem [shape: f32[576,192], index: 2, kind: input, shape index: {}]
  %s3 = inlined_call_operand.vmem [shape: f32[576,192], index: 3, kind: input, shape index: {}]
  %s4 = inlined_call_operand.vmem [shape: f32[1,576], index: 4, kind: input, shape index: {}]
  %s5 = inlined_call_operand.vmem [shape: f32[1,192], index: 5, kind: input, shape index: {}]
  %s6 = inlined_call_operand.vmem [shape: f32[1,192], index: 6, kind: input, shape index: {}]
  %s7 = inlined_call_operand.hbm [shape: f32[16,576], index: 7, kind: output, shape index: {0}]
  %s8 = inlined_call_operand.hbm [shape: f32[16,192], index: 8, kind: output, shape index: {1}]
  %s9 = inlined_call_operand.hbm [shape: f32[16,192], index: 9, kind: output, shape index: {2}]
  %10 = xla_tuple %s7, %s8, %s9
  %s11 = sld [smem:[#allocation0]]
  $region54: #{tpu_custom_call.1} parent=0
    _
  %s13 = ssub.s32 1, %s11
  %s14 = scalar_select 0, %s13, %s11
  $region1: #{tpu_custom_call.1} parent=0
    #allocation2 [shape = 'u8[40960]{0}', space=vmem, size = 0xa000, scoped, tag = 'output window, operand 0, single buffered']
    #allocation3 [shape = 's32[1]{0}', space=sflag, size = 0x4, scoped, tag = 'scoped memory for tpu_custom_call.1']
    #allocation4 [shape = 'u8[16384]{0}', space=vmem, size = 0x4000, scoped, tag = 'output window, operand 1, single buffered']
    #allocation5 [shape = 's32[1]{0}', space=sflag, size = 0x4, scoped, tag = 'scoped memory for tpu_custom_call.1']
    #allocation6 [shape = 'u8[16384]{0}', space=vmem, size = 0x4000, scoped, tag = 'output window, operand 2, single buffered']
    %15 = vsyncpa [#allocation3], 0
    %16 = vsyncpa [#allocation5], 0
    // Predicated region
    $region2: #{tpu_custom_call.1} parent=1 // pred_check
      _
    $region3: #{tpu_custom_call.1} parent=1 // pred_check_branch
      %18 = sbr.rel (0) target = $region5
    $region4: #{tpu_custom_call.1} parent=1 // pred_region
      _
    $region5: #{tpu_custom_call.1} parent=1 // pred_fallthru
      _
    // Predicated region
    $region6: #{tpu_custom_call.1} parent=1 // pred_check
      _
    $region7: #{tpu_custom_call.1} parent=1 // pred_check_branch
      %20 = sbr.rel (0) target = $region9
    $region8: #{tpu_custom_call.1} parent=1 // pred_region
      _
    $region9: #{tpu_custom_call.1} parent=1 // pred_fallthru
      _
    // Predicated region
    $region10: #{tpu_custom_call.1} parent=1 // pred_check
      _
    $region11: #{tpu_custom_call.1} parent=1 // pred_check_branch
      %22 = sbr.rel (0) target = $region13
    $region12: #{tpu_custom_call.1} parent=1 // pred_region
      _
    $region13: #{tpu_custom_call.1} parent=1 // pred_fallthru
      _
    // Predicated region
    $region14: #{tpu_custom_call.1} parent=1 // pred_check
      _
    $region15: #{tpu_custom_call.1} parent=1 // pred_check_branch
      %24 = sbr.rel (0) target = $region17
    $region16: #{tpu_custom_call.1} parent=1 // pred_region
      _
    $region17: #{tpu_custom_call.1} parent=1 // pred_fallthru
      _
    // Predicated region
    $region18: #{tpu_custom_call.1} parent=1 // pred_check
      _
    $region19: #{tpu_custom_call.1} parent=1 // pred_check_branch
      %26 = sbr.rel (0) target = $region21
    $region20: #{tpu_custom_call.1} parent=1 // pred_region
      _
    $region21: #{tpu_custom_call.1} parent=1 // pred_fallthru
      _
    // Predicated region
    $region22: #{tpu_custom_call.1} parent=1 // pred_check
      _
    $region23: #{tpu_custom_call.1} parent=1 // pred_check_branch
      %28 = sbr.rel (0) target = $region25
    $region24: #{tpu_custom_call.1} parent=1 // pred_region
      _
    $region25: #{tpu_custom_call.1} parent=1 // pred_fallthru
      _
    // Predicated region
    $region26: #{tpu_custom_call.1} parent=1 // pred_check
      _
    $region27: #{tpu_custom_call.1} parent=1 // pred_check_branch
      %30 = sbr.rel (0) target = $region29
    $region28: #{tpu_custom_call.1} parent=1 // pred_region
      _
    $region29: #{tpu_custom_call.1} parent=1 // pred_fallthru
      _
    %v31 = vld [vmem:[%s0] sm:$0xff]
    %v32 = vld [vmem:[%s0 + $0x8] sm:$0xff]
    %v33 = vld [vmem:[%s0 + $0x10] sm:$0xff]
    %v34 = vld [vmem:[%s0 + $0x18] sm:$0xff]
    %v35 = vld [vmem:[%s0 + $0x20] sm:$0xff]
    %v36 = vld [vmem:[%s0 + $0x28] sm:$0xff]
    %v37 = vld [vmem:[%s0 + $0x30] sm:$0xff]
    %v38 = vld [vmem:[%s0 + $0x38] sm:$0xff]
    %v39 = vld [vmem:[%s0 + $0x40] sm:$0xff]
    %v40 = vld [vmem:[%s0 + $0x48] sm:$0xff]
    %v41 = vld [vmem:[%s1] sm:$0xff]
    %v42 = vld [vmem:[%s1 + $0x8] sm:$0xff]
    %v43 = vld [vmem:[%s1 + $0x10] sm:$0xff]
    %v44 = vld [vmem:[%s1 + $0x18] sm:$0xff]
    %v45 = vld [vmem:[%s1 + $0x20] sm:$0xff]
    %v46 = vld [vmem:[%s1 + $0x28] sm:$0xff]
    %v47 = vld [vmem:[%s1 + $0x30] sm:$0xff]
    %v48 = vld [vmem:[%s1 + $0x38] sm:$0xff]
    %v49 = vld [vmem:[%s1 + $0x40] sm:$0xff]
    %v50 = vld [vmem:[%s1 + $0x48] sm:$0xff]
    %v51 = vld [vmem:[%s1 + $0x50] sm:$0xff]
    %v52 = vld [vmem:[%s1 + $0x58] sm:$0xff]
    %v53 = vld [vmem:[%s1 + $0x60] sm:$0xff]
    %v54 = vld [vmem:[%s1 + $0x68] sm:$0xff]
    %v55 = vld [vmem:[%s1 + $0x70] sm:$0xff]
    %v56 = vld [vmem:[%s1 + $0x78] sm:$0xff]
    %v57 = vld [vmem:[%s1 + $0x80] sm:$0xff]
    %v58 = vld [vmem:[%s1 + $0x88] sm:$0xff]
    %v59 = vld [vmem:[%s1 + $0x90] sm:$0xff]
    %v60 = vld [vmem:[%s1 + $0x98] sm:$0xff]
    %v61 = vld [vmem:[%s1 + $0xa0] sm:$0xff]
    %v62 = vld [vmem:[%s1 + $0xa8] sm:$0xff]
    %v63 = vld [vmem:[%s1 + $0xb0] sm:$0xff]
    %v64 = vld [vmem:[%s1 + $0xb8] sm:$0xff]
    %v65 = vld [vmem:[%s1 + $0xc0] sm:$0xff]
    %v66 = vld [vmem:[%s1 + $0xc8] sm:$0xff]
    %v67 = vld [vmem:[%s1 + $0xd0] sm:$0xff]
    %v68 = vld [vmem:[%s1 + $0xd8] sm:$0xff]
    %v69 = vld [vmem:[%s1 + $0xe0] sm:$0xff]
    %v70 = vld [vmem:[%s1 + $0xe8] sm:$0xff]
    %v71 = vld [vmem:[%s1 + $0xf0] sm:$0xff]
    %v72 = vld [vmem:[%s1 + $0xf8] sm:$0xff]
    %v73 = vld [vmem:[%s1 + $0x100] sm:$0xff]
    %v74 = vld [vmem:[%s1 + $0x108] sm:$0xff]
    %v75 = vld [vmem:[%s1 + $0x110] sm:$0xff]
    %v76 = vld [vmem:[%s1 + $0x118] sm:$0xff]
    %v77 = vld [vmem:[%s1 + $0x120] sm:$0xff]
    %v78 = vld [vmem:[%s1 + $0x128] sm:$0xff]
    %v79 = vld [vmem:[%s1 + $0x130] sm:$0xff]
    %v80 = vld [vmem:[%s1 + $0x138] sm:$0xff]
    %v81 = vld [vmem:[%s1 + $0x140] sm:$0xff]
    %v82 = vld [vmem:[%s1 + $0x148] sm:$0xff]
    %v83 = vld [vmem:[%s1 + $0x150] sm:$0xff]
    %v84 = vld [vmem:[%s1 + $0x158] sm:$0xff]
    %v85 = vld [vmem:[%s1 + $0x160] sm:$0xff]
    %v86 = vld [vmem:[%s1 + $0x168] sm:$0xff]
    %v87 = vld [vmem:[%s1 + $0x170] sm:$0xff]
    %v88 = vld [vmem:[%s1 + $0x178] sm:$0xff]
    %v89 = vld [vmem:[%s1 + $0x180] sm:$0xff]
    %v90 = vld [vmem:[%s1 + $0x188] sm:$0xff]
    %v91 = vld [vmem:[%s1 + $0x190] sm:$0xff]
    %v92 = vld [vmem:[%s1 + $0x198] sm:$0xff]
    %v93 = vld [vmem:[%s1 + $0x1a0] sm:$0xff]
    %v94 = vld [vmem:[%s1 + $0x1a8] sm:$0xff]
    %v95 = vld [vmem:[%s1 + $0x1b0] sm:$0xff]
    %v96 = vld [vmem:[%s1 + $0x1b8] sm:$0xff]
    %v97 = vld [vmem:[%s1 + $0x1c0] sm:$0xff]
    %v98 = vld [vmem:[%s1 + $0x1c8] sm:$0xff]
    %v99 = vld [vmem:[%s1 + $0x1d0] sm:$0xff]
    %v100 = vld [vmem:[%s1 + $0x1d8] sm:$0xff]
    %v101 = vld [vmem:[%s1 + $0x1e0] sm:$0xff]
    %v102 = vld [vmem:[%s1 + $0x1e8] sm:$0xff]
    %v103 = vld [vmem:[%s1 + $0x1f0] sm:$0xff]
    %v104 = vld [vmem:[%s1 + $0x1f8] sm:$0xff]
    %v105 = vld [vmem:[%s1 + $0x200] sm:$0xff]
    %v106 = vld [vmem:[%s1 + $0x208] sm:$0xff]
    %v107 = vld [vmem:[%s1 + $0x210] sm:$0xff]
    %v108 = vld [vmem:[%s1 + $0x218] sm:$0xff]
    %v109 = vld [vmem:[%s1 + $0x220] sm:$0xff]
    %v110 = vld [vmem:[%s1 + $0x228] sm:$0xff]
    %v111 = vld [vmem:[%s1 + $0x230] sm:$0xff]
    %v112 = vld [vmem:[%s1 + $0x238] sm:$0xff]
    %v113 = vld [vmem:[%s1 + $0x240] sm:$0xff]
    %v114 = vld [vmem:[%s1 + $0x248] sm:$0xff]
    %v115 = vld [vmem:[%s1 + $0x250] sm:$0xff]
    %v116 = vld [vmem:[%s1 + $0x258] sm:$0xff]
    %v117 = vld [vmem:[%s1 + $0x260] sm:$0xff]
    %v118 = vld [vmem:[%s1 + $0x268] sm:$0xff]
    %v119 = vld [vmem:[%s1 + $0x270] sm:$0xff]
    %v120 = vld [vmem:[%s1 + $0x278] sm:$0xff]
    %v121 = vld [vmem:[%s1 + $0x280] sm:$0xff]
    %v122 = vld [vmem:[%s1 + $0x288] sm:$0xff]
    %v123 = vld [vmem:[%s1 + $0x290] sm:$0xff]
    %v124 = vld [vmem:[%s1 + $0x298] sm:$0xff]
    %v125 = vld [vmem:[%s1 + $0x2a0] sm:$0xff]
    %v126 = vld [vmem:[%s1 + $0x2a8] sm:$0xff]
    %v127 = vld [vmem:[%s1 + $0x2b0] sm:$0xff]
    %v128 = vld [vmem:[%s1 + $0x2b8] sm:$0xff]
    %v129 = vld [vmem:[%s1 + $0x2c0] sm:$0xff]
    %v130 = vld [vmem:[%s1 + $0x2c8] sm:$0xff]
    %v131 = vld [vmem:[%s1 + $0x2d0] sm:$0xff]
    %v132 = vld [vmem:[%s1 + $0x2d8] sm:$0xff]
    %v133 = vld [vmem:[%s1 + $0x2e0] sm:$0xff]
    %v134 = vld [vmem:[%s1 + $0x2e8] sm:$0xff]
    %v135 = vld [vmem:[%s1 + $0x2f0] sm:$0xff]
    %v136 = vld [vmem:[%s1 + $0x2f8] sm:$0xff]
    %v137 = vld [vmem:[%s1 + $0x300] sm:$0xff]
    %v138 = vld [vmem:[%s1 + $0x308] sm:$0xff]
    %v139 = vld [vmem:[%s1 + $0x310] sm:$0xff]
    %v140 = vld [vmem:[%s1 + $0x318] sm:$0xff]
    %v141 = vld [vmem:[%s1 + $0x320] sm:$0xff]
    %v142 = vld [vmem:[%s1 + $0x328] sm:$0xff]
    %v143 = vld [vmem:[%s1 + $0x330] sm:$0xff]
    %v144 = vld [vmem:[%s1 + $0x338] sm:$0xff]
    %v145 = vld [vmem:[%s1 + $0x340] sm:$0xff]
    %v146 = vld [vmem:[%s1 + $0x348] sm:$0xff]
    %v147 = vld [vmem:[%s1 + $0x350] sm:$0xff]
    %v148 = vld [vmem:[%s1 + $0x358] sm:$0xff]
    %v149 = vld [vmem:[%s1 + $0x360] sm:$0xff]
    %v150 = vld [vmem:[%s1 + $0x368] sm:$0xff]
    %v151 = vld [vmem:[%s1 + $0x370] sm:$0xff]
    %v152 = vld [vmem:[%s1 + $0x378] sm:$0xff]
    %v153 = vld [vmem:[%s1 + $0x380] sm:$0xff]
    %v154 = vld [vmem:[%s1 + $0x388] sm:$0xff]
    %v155 = vld [vmem:[%s1 + $0x390] sm:$0xff]
    %v156 = vld [vmem:[%s1 + $0x398] sm:$0xff]
    %v157 = vld [vmem:[%s1 + $0x3a0] sm:$0xff]
    %v158 = vld [vmem:[%s1 + $0x3a8] sm:$0xff]
    %v159 = vld [vmem:[%s1 + $0x3b0] sm:$0xff]
    %v160 = vld [vmem:[%s1 + $0x3b8] sm:$0xff]
    %v161 = vld [vmem:[%s1 + $0x3c0] sm:$0xff]
    %v162 = vld [vmem:[%s1 + $0x3c8] sm:$0xff]
    %v163 = vld [vmem:[%s1 + $0x3d0] sm:$0xff]
    %v164 = vld [vmem:[%s1 + $0x3d8] sm:$0xff]
    %v165 = vld [vmem:[%s1 + $0x3e0] sm:$0xff]
    %v166 = vld [vmem:[%s1 + $0x3e8] sm:$0xff]
    %v167 = vld [vmem:[%s1 + $0x3f0] sm:$0xff]
    %v168 = vld [vmem:[%s1 + $0x3f8] sm:$0xff]
    %v169 = vld [vmem:[%s1 + $0x400] sm:$0xff]
    %v170 = vld [vmem:[%s1 + $0x408] sm:$0xff]
    %v171 = vld [vmem:[%s1 + $0x410] sm:$0xff]
    %v172 = vld [vmem:[%s1 + $0x418] sm:$0xff]
    %v173 = vld [vmem:[%s1 + $0x420] sm:$0xff]
    %v174 = vld [vmem:[%s1 + $0x428] sm:$0xff]
    %v175 = vld [vmem:[%s1 + $0x430] sm:$0xff]
    %v176 = vld [vmem:[%s1 + $0x438] sm:$0xff]
    %v177 = vld [vmem:[%s1 + $0x440] sm:$0xff]
    %v178 = vld [vmem:[%s1 + $0x448] sm:$0xff]
    %v179 = vld [vmem:[%s1 + $0x450] sm:$0xff]
    %v180 = vld [vmem:[%s1 + $0x458] sm:$0xff]
    %v181 = vld [vmem:[%s1 + $0x460] sm:$0xff]
    %v182 = vld [vmem:[%s1 + $0x468] sm:$0xff]
    %v183 = vld [vmem:[%s1 + $0x470] sm:$0xff]
    %v184 = vld [vmem:[%s1 + $0x478] sm:$0xff]
    %v185 = vld [vmem:[%s1 + $0x480] sm:$0xff]
    %v186 = vld [vmem:[%s1 + $0x488] sm:$0xff]
    %v187 = vld [vmem:[%s1 + $0x490] sm:$0xff]
    %v188 = vld [vmem:[%s1 + $0x498] sm:$0xff]
    %v189 = vld [vmem:[%s1 + $0x4a0] sm:$0xff]
    %v190 = vld [vmem:[%s1 + $0x4a8] sm:$0xff]
    %v191 = vld [vmem:[%s1 + $0x4b0] sm:$0xff]
    %v192 = vld [vmem:[%s1 + $0x4b8] sm:$0xff]
    %v193 = vld [vmem:[%s1 + $0x4c0] sm:$0xff]
    %v194 = vld [vmem:[%s1 + $0x4c8] sm:$0xff]
    %v195 = vld [vmem:[%s1 + $0x4d0] sm:$0xff]
    %v196 = vld [vmem:[%s1 + $0x4d8] sm:$0xff]
    %v197 = vld [vmem:[%s1 + $0x4e0] sm:$0xff]
    %v198 = vld [vmem:[%s1 + $0x4e8] sm:$0xff]
    %v199 = vld [vmem:[%s1 + $0x4f0] sm:$0xff]
    %v200 = vld [vmem:[%s1 + $0x4f8] sm:$0xff]
    %v201 = vld [vmem:[%s1 + $0x500] sm:$0xff]
    %v202 = vld [vmem:[%s1 + $0x508] sm:$0xff]
    %v203 = vld [vmem:[%s1 + $0x510] sm:$0xff]
    %v204 = vld [vmem:[%s1 + $0x518] sm:$0xff]
    %v205 = vld [vmem:[%s1 + $0x520] sm:$0xff]
    %v206 = vld [vmem:[%s1 + $0x528] sm:$0xff]
    %v207 = vld [vmem:[%s1 + $0x530] sm:$0xff]
    %v208 = vld [vmem:[%s1 + $0x538] sm:$0xff]
    %v209 = vld [vmem:[%s1 + $0x540] sm:$0xff]
    %v210 = vld [vmem:[%s1 + $0x548] sm:$0xff]
    %v211 = vld [vmem:[%s1 + $0x550] sm:$0xff]
    %v212 = vld [vmem:[%s1 + $0x558] sm:$0xff]
    %v213 = vld [vmem:[%s1 + $0x560] sm:$0xff]
    %v214 = vld [vmem:[%s1 + $0x568] sm:$0xff]
    %v215 = vld [vmem:[%s1 + $0x570] sm:$0xff]
    %v216 = vld [vmem:[%s1 + $0x578] sm:$0xff]
    %v217 = vld [vmem:[%s1 + $0x580] sm:$0xff]
    %v218 = vld [vmem:[%s1 + $0x588] sm:$0xff]
    %v219 = vld [vmem:[%s1 + $0x590] sm:$0xff]
    %v220 = vld [vmem:[%s1 + $0x598] sm:$0xff]
    %v221 = vld [vmem:[%s1 + $0x5a0] sm:$0xff]
    %v222 = vld [vmem:[%s1 + $0x5a8] sm:$0xff]
    %v223 = vld [vmem:[%s1 + $0x5b0] sm:$0xff]
    %v224 = vld [vmem:[%s1 + $0x5b8] sm:$0xff]
    %v225 = vld [vmem:[%s1 + $0x5c0] sm:$0xff]
    %v226 = vld [vmem:[%s1 + $0x5c8] sm:$0xff]
    %v227 = vld [vmem:[%s1 + $0x5d0] sm:$0xff]
    %v228 = vld [vmem:[%s1 + $0x5d8] sm:$0xff]
    %v229 = vld [vmem:[%s1 + $0x5e0] sm:$0xff]
    %v230 = vld [vmem:[%s1 + $0x5e8] sm:$0xff]
    %v231 = vld [vmem:[%s1 + $0x5f0] sm:$0xff]
    %v232 = vld [vmem:[%s1 + $0x5f8] sm:$0xff]
    %v233 = vld [vmem:[%s1 + $0x600] sm:$0xff]
    %v234 = vld [vmem:[%s1 + $0x608] sm:$0xff]
    %v235 = vld [vmem:[%s1 + $0x610] sm:$0xff]
    %v236 = vld [vmem:[%s1 + $0x618] sm:$0xff]
    %v237 = vld [vmem:[%s1 + $0x620] sm:$0xff]
    %v238 = vld [vmem:[%s1 + $0x628] sm:$0xff]
    %v239 = vld [vmem:[%s1 + $0x630] sm:$0xff]
    %v240 = vld [vmem:[%s1 + $0x638] sm:$0xff]
    %v241 = vld [vmem:[%s1 + $0x640] sm:$0xff]
    %v242 = vld [vmem:[%s1 + $0x648] sm:$0xff]
    %v243 = vld [vmem:[%s1 + $0x650] sm:$0xff]
    %v244 = vld [vmem:[%s1 + $0x658] sm:$0xff]
    %v245 = vld [vmem:[%s1 + $0x660] sm:$0xff]
    %v246 = vld [vmem:[%s1 + $0x668] sm:$0xff]
    %v247 = vld [vmem:[%s1 + $0x670] sm:$0xff]
    %v248 = vld [vmem:[%s1 + $0x678] sm:$0xff]
    %v249 = vld [vmem:[%s1 + $0x680] sm:$0xff]
    %v250 = vld [vmem:[%s1 + $0x688] sm:$0xff]
    %v251 = vld [vmem:[%s1 + $0x690] sm:$0xff]
    %v252 = vld [vmem:[%s1 + $0x698] sm:$0xff]
    %v253 = vld [vmem:[%s1 + $0x6a0] sm:$0xff]
    %v254 = vld [vmem:[%s1 + $0x6a8] sm:$0xff]
    %v255 = vld [vmem:[%s1 + $0x6b0] sm:$0xff]
    %v256 = vld [vmem:[%s1 + $0x6b8] sm:$0xff]
    %v257 = vld [vmem:[%s1 + $0x6c0] sm:$0xff]
    %v258 = vld [vmem:[%s1 + $0x6c8] sm:$0xff]
    %v259 = vld [vmem:[%s1 + $0x6d0] sm:$0xff]
    %v260 = vld [vmem:[%s1 + $0x6d8] sm:$0xff]
    %v261 = vld [vmem:[%s1 + $0x6e0] sm:$0xff]
    %v262 = vld [vmem:[%s1 + $0x6e8] sm:$0xff]
    %v263 = vld [vmem:[%s1 + $0x6f0] sm:$0xff]
    %v264 = vld [vmem:[%s1 + $0x6f8] sm:$0xff]
    %v265 = vld [vmem:[%s1 + $0x700] sm:$0xff]
    %v266 = vld [vmem:[%s1 + $0x708] sm:$0xff]
    %v267 = vld [vmem:[%s1 + $0x710] sm:$0xff]
    %v268 = vld [vmem:[%s1 + $0x718] sm:$0xff]
    %v269 = vld [vmem:[%s1 + $0x720] sm:$0xff]
    %v270 = vld [vmem:[%s1 + $0x728] sm:$0xff]
    %v271 = vld [vmem:[%s1 + $0x730] sm:$0xff]
    %v272 = vld [vmem:[%s1 + $0x738] sm:$0xff]
    %v273 = vld [vmem:[%s1 + $0x740] sm:$0xff]
    %v274 = vld [vmem:[%s1 + $0x748] sm:$0xff]
    %v275 = vld [vmem:[%s1 + $0x750] sm:$0xff]
    %v276 = vld [vmem:[%s1 + $0x758] sm:$0xff]
    %v277 = vld [vmem:[%s1 + $0x760] sm:$0xff]
    %v278 = vld [vmem:[%s1 + $0x768] sm:$0xff]
    %v279 = vld [vmem:[%s1 + $0x770] sm:$0xff]
    %v280 = vld [vmem:[%s1 + $0x778] sm:$0xff]
    %v281 = vld [vmem:[%s1 + $0x780] sm:$0xff]
    %v282 = vld [vmem:[%s1 + $0x788] sm:$0xff]
    %v283 = vld [vmem:[%s1 + $0x790] sm:$0xff]
    %v284 = vld [vmem:[%s1 + $0x798] sm:$0xff]
    %v285 = vld [vmem:[%s1 + $0x7a0] sm:$0xff]
    %v286 = vld [vmem:[%s1 + $0x7a8] sm:$0xff]
    %v287 = vld [vmem:[%s1 + $0x7b0] sm:$0xff]
    %v288 = vld [vmem:[%s1 + $0x7b8] sm:$0xff]
    %v289 = vld [vmem:[%s1 + $0x7c0] sm:$0xff]
    %v290 = vld [vmem:[%s1 + $0x7c8] sm:$0xff]
    %v291 = vld [vmem:[%s1 + $0x7d0] sm:$0xff]
    %v292 = vld [vmem:[%s1 + $0x7d8] sm:$0xff]
    %v293 = vld [vmem:[%s1 + $0x7e0] sm:$0xff]
    %v294 = vld [vmem:[%s1 + $0x7e8] sm:$0xff]
    %v295 = vld [vmem:[%s1 + $0x7f0] sm:$0xff]
    %v296 = vld [vmem:[%s1 + $0x7f8] sm:$0xff]
    %v297 = vld [vmem:[%s1 + $0x800] sm:$0xff]
    %v298 = vld [vmem:[%s1 + $0x808] sm:$0xff]
    %v299 = vld [vmem:[%s1 + $0x810] sm:$0xff]
    %v300 = vld [vmem:[%s1 + $0x818] sm:$0xff]
    %v301 = vld [vmem:[%s1 + $0x820] sm:$0xff]
    %v302 = vld [vmem:[%s1 + $0x828] sm:$0xff]
    %v303 = vld [vmem:[%s1 + $0x830] sm:$0xff]
    %v304 = vld [vmem:[%s1 + $0x838] sm:$0xff]
    %v305 = vld [vmem:[%s1 + $0x840] sm:$0xff]
    %v306 = vld [vmem:[%s1 + $0x848] sm:$0xff]
    %v307 = vld [vmem:[%s1 + $0x850] sm:$0xff]
    %v308 = vld [vmem:[%s1 + $0x858] sm:$0xff]
    %v309 = vld [vmem:[%s1 + $0x860] sm:$0xff]
    %v310 = vld [vmem:[%s1 + $0x868] sm:$0xff]
    %v311 = vld [vmem:[%s1 + $0x870] sm:$0xff]
    %v312 = vld [vmem:[%s1 + $0x878] sm:$0xff]
    %v313 = vld [vmem:[%s1 + $0x880] sm:$0xff]
    %v314 = vld [vmem:[%s1 + $0x888] sm:$0xff]
    %v315 = vld [vmem:[%s1 + $0x890] sm:$0xff]
    %v316 = vld [vmem:[%s1 + $0x898] sm:$0xff]
    %v317 = vld [vmem:[%s1 + $0x8a0] sm:$0xff]
    %v318 = vld [vmem:[%s1 + $0x8a8] sm:$0xff]
    %v319 = vld [vmem:[%s1 + $0x8b0] sm:$0xff]
    %v320 = vld [vmem:[%s1 + $0x8b8] sm:$0xff]
    %v321 = vld [vmem:[%s1 + $0x8c0] sm:$0xff]
    %v322 = vld [vmem:[%s1 + $0x8c8] sm:$0xff]
    %v323 = vld [vmem:[%s1 + $0x8d0] sm:$0xff]
    %v324 = vld [vmem:[%s1 + $0x8d8] sm:$0xff]
    %v325 = vld [vmem:[%s1 + $0x8e0] sm:$0xff]
    %v326 = vld [vmem:[%s1 + $0x8e8] sm:$0xff]
    %v327 = vld [vmem:[%s1 + $0x8f0] sm:$0xff]
    %v328 = vld [vmem:[%s1 + $0x8f8] sm:$0xff]
    %v329 = vld [vmem:[%s1 + $0x900] sm:$0xff]
    %v330 = vld [vmem:[%s1 + $0x908] sm:$0xff]
    %v331 = vld [vmem:[%s1 + $0x910] sm:$0xff]
    %v332 = vld [vmem:[%s1 + $0x918] sm:$0xff]
    %v333 = vld [vmem:[%s1 + $0x920] sm:$0xff]
    %v334 = vld [vmem:[%s1 + $0x928] sm:$0xff]
    %v335 = vld [vmem:[%s1 + $0x930] sm:$0xff]
    %v336 = vld [vmem:[%s1 + $0x938] sm:$0xff]
    %v337 = vld [vmem:[%s1 + $0x940] sm:$0xff]
    %v338 = vld [vmem:[%s1 + $0x948] sm:$0xff]
    %v339 = vld [vmem:[%s1 + $0x950] sm:$0xff]
    %v340 = vld [vmem:[%s1 + $0x958] sm:$0xff]
    %v341 = vld [vmem:[%s1 + $0x960] sm:$0xff]
    %v342 = vld [vmem:[%s1 + $0x968] sm:$0xff]
    %v343 = vld [vmem:[%s1 + $0x970] sm:$0xff]
    %v344 = vld [vmem:[%s1 + $0x978] sm:$0xff]
    %v345 = vld [vmem:[%s1 + $0x980] sm:$0xff]
    %v346 = vld [vmem:[%s1 + $0x988] sm:$0xff]
    %v347 = vld [vmem:[%s1 + $0x990] sm:$0xff]
    %v348 = vld [vmem:[%s1 + $0x998] sm:$0xff]
    %v349 = vld [vmem:[%s1 + $0x9a0] sm:$0xff]
    %v350 = vld [vmem:[%s1 + $0x9a8] sm:$0xff]
    %v351 = vld [vmem:[%s1 + $0x9b0] sm:$0xff]
    %v352 = vld [vmem:[%s1 + $0x9b8] sm:$0xff]
    %v353 = vld [vmem:[%s1 + $0x9c0] sm:$0xff]
    %v354 = vld [vmem:[%s1 + $0x9c8] sm:$0xff]
    %v355 = vld [vmem:[%s1 + $0x9d0] sm:$0xff]
    %v356 = vld [vmem:[%s1 + $0x9d8] sm:$0xff]
    %v357 = vld [vmem:[%s1 + $0x9e0] sm:$0xff]
    %v358 = vld [vmem:[%s1 + $0x9e8] sm:$0xff]
    %v359 = vld [vmem:[%s1 + $0x9f0] sm:$0xff]
    %v360 = vld [vmem:[%s1 + $0x9f8] sm:$0xff]
    %v361 = vld [vmem:[%s1 + $0xa00] sm:$0xff]
    %v362 = vld [vmem:[%s1 + $0xa08] sm:$0xff]
    %v363 = vld [vmem:[%s1 + $0xa10] sm:$0xff]
    %v364 = vld [vmem:[%s1 + $0xa18] sm:$0xff]
    %v365 = vld [vmem:[%s1 + $0xa20] sm:$0xff]
    %v366 = vld [vmem:[%s1 + $0xa28] sm:$0xff]
    %v367 = vld [vmem:[%s1 + $0xa30] sm:$0xff]
    %v368 = vld [vmem:[%s1 + $0xa38] sm:$0xff]
    %v369 = vld [vmem:[%s1 + $0xa40] sm:$0xff]
    %v370 = vld [vmem:[%s1 + $0xa48] sm:$0xff]
    %v371 = vld [vmem:[%s1 + $0xa50] sm:$0xff]
    %v372 = vld [vmem:[%s1 + $0xa58] sm:$0xff]
    %v373 = vld [vmem:[%s1 + $0xa60] sm:$0xff]
    %v374 = vld [vmem:[%s1 + $0xa68] sm:$0xff]
    %v375 = vld [vmem:[%s1 + $0xa70] sm:$0xff]
    %v376 = vld [vmem:[%s1 + $0xa78] sm:$0xff]
    %v377 = vld [vmem:[%s1 + $0xa80] sm:$0xff]
    %v378 = vld [vmem:[%s1 + $0xa88] sm:$0xff]
    %v379 = vld [vmem:[%s1 + $0xa90] sm:$0xff]
    %v380 = vld [vmem:[%s1 + $0xa98] sm:$0xff]
    %v381 = vld [vmem:[%s1 + $0xaa0] sm:$0xff]
    %v382 = vld [vmem:[%s1 + $0xaa8] sm:$0xff]
    %v383 = vld [vmem:[%s1 + $0xab0] sm:$0xff]
    %v384 = vld [vmem:[%s1 + $0xab8] sm:$0xff]
    %v385 = vld [vmem:[%s1 + $0xac0] sm:$0xff]
    %v386 = vld [vmem:[%s1 + $0xac8] sm:$0xff]
    %v387 = vld [vmem:[%s1 + $0xad0] sm:$0xff]
    %v388 = vld [vmem:[%s1 + $0xad8] sm:$0xff]
    %v389 = vld [vmem:[%s1 + $0xae0] sm:$0xff]
    %v390 = vld [vmem:[%s1 + $0xae8] sm:$0xff]
    %v391 = vld [vmem:[%s1 + $0xaf0] sm:$0xff]
    %v392 = vld [vmem:[%s1 + $0xaf8] sm:$0xff]
    %v393 = vld [vmem:[%s1 + $0xb00] sm:$0xff]
    %v394 = vld [vmem:[%s1 + $0xb08] sm:$0xff]
    %v395 = vld [vmem:[%s1 + $0xb10] sm:$0xff]
    %v396 = vld [vmem:[%s1 + $0xb18] sm:$0xff]
    %v397 = vld [vmem:[%s1 + $0xb20] sm:$0xff]
    %v398 = vld [vmem:[%s1 + $0xb28] sm:$0xff]
    %v399 = vld [vmem:[%s1 + $0xb30] sm:$0xff]
    %v400 = vld [vmem:[%s1 + $0xb38] sm:$0xff]
    %v401 = vld [vmem:[%s4] sm:$0x1f]
    %v403 = vperm.slane %v401, 0
    %v404 = vperm.slane %v401, 1
    %v405 = vperm.slane %v401, 2
    %v406 = vperm.slane %v401, 3
    %v407 = vperm.slane %v401, 4
    %vm413 = vcmask 523264
    %v415 = vsel %vm413, %v35, 0
    %v418 = vsel %vm413, %v40, 0
    %420 = vmatpush.msra.mxu0 %v116
    %421 = vmatpush.msra.mxu0 %v111
    %422 = vmatpush.msra.mxu0 %v106
    %423 = vmatpush.msra.mxu0 %v101
    %424 = vmatpush.msra.mxu0 %v96
    %425 = vmatpush.msra.mxu0 %v91
    %426 = vmatpush.msra.mxu0 %v86
    %427 = vmatpush.msra.mxu0 %v81
    %428 = vmatpush.msra.mxu0 %v76
    %429 = vmatpush.msra.mxu0 %v71
    %430 = vmatpush.msra.mxu0 %v66
    %431 = vmatpush.msra.mxu0 %v61
    %432 = vmatpush.msra.mxu0 %v56
    %433 = vmatpush.msra.mxu0 %v51
    %434 = vmatpush.msra.mxu0 %v46
    %435 = vmatpush.msra.mxu0 %v41
    %436 = vmatmul.f32.gmra.mxu0 %v31
    %v437 = vpop.f32.mrf.mxu0
    %v438 = vadd.f32 %v403, %v437
    %439 = vmatmul.f32.gmra.mxu0 %v36
    %v440 = vpop.f32.mrf.mxu0
    %v441 = vadd.f32 %v403, %v440
    %442 = vdwg.mxu0
    %443 = vmatpush.msra.mxu0 %v196
    %444 = vmatpush.msra.mxu0 %v191
    %445 = vmatpush.msra.mxu0 %v186
    %446 = vmatpush.msra.mxu0 %v181
    %447 = vmatpush.msra.mxu0 %v176
    %448 = vmatpush.msra.mxu0 %v171
    %449 = vmatpush.msra.mxu0 %v166
    %450 = vmatpush.msra.mxu0 %v161
    %451 = vmatpush.msra.mxu0 %v156
    %452 = vmatpush.msra.mxu0 %v151
    %453 = vmatpush.msra.mxu0 %v146
    %454 = vmatpush.msra.mxu0 %v141
    %455 = vmatpush.msra.mxu0 %v136
    %456 = vmatpush.msra.mxu0 %v131
    %457 = vmatpush.msra.mxu0 %v126
    %458 = vmatpush.msra.mxu0 %v121
    %459 = vmatmul.f32.gmra.mxu0 %v32
    %v460 = vpop.f32.mrf.mxu0
    %v461 = vadd.f32 %v438, %v460
    %462 = vmatmul.f32.gmra.mxu0 %v37
    %v463 = vpop.f32.mrf.mxu0
    %v464 = vadd.f32 %v441, %v463
    %465 = vdwg.mxu0
    %466 = vmatpush.msra.mxu0 %v276
    %467 = vmatpush.msra.mxu0 %v271
    %468 = vmatpush.msra.mxu0 %v266
    %469 = vmatpush.msra.mxu0 %v261
    %470 = vmatpush.msra.mxu0 %v256
    %471 = vmatpush.msra.mxu0 %v251
    %472 = vmatpush.msra.mxu0 %v246
    %473 = vmatpush.msra.mxu0 %v241
    %474 = vmatpush.msra.mxu0 %v236
    %475 = vmatpush.msra.mxu0 %v231
    %476 = vmatpush.msra.mxu0 %v226
    %477 = vmatpush.msra.mxu0 %v221
    %478 = vmatpush.msra.mxu0 %v216
    %479 = vmatpush.msra.mxu0 %v211
    %480 = vmatpush.msra.mxu0 %v206
    %481 = vmatpush.msra.mxu0 %v201
    %482 = vmatmul.f32.gmra.mxu0 %v33
    %v483 = vpop.f32.mrf.mxu0
    %v484 = vadd.f32 %v461, %v483
    %485 = vmatmul.f32.gmra.mxu0 %v38
    %v486 = vpop.f32.mrf.mxu0
    %v487 = vadd.f32 %v464, %v486
    %488 = vdwg.mxu0
    %489 = vmatpush.msra.mxu0 %v356
    %490 = vmatpush.msra.mxu0 %v351
    %491 = vmatpush.msra.mxu0 %v346
    %492 = vmatpush.msra.mxu0 %v341
    %493 = vmatpush.msra.mxu0 %v336
    %494 = vmatpush.msra.mxu0 %v331
    %495 = vmatpush.msra.mxu0 %v326
    %496 = vmatpush.msra.mxu0 %v321
    %497 = vmatpush.msra.mxu0 %v316
    %498 = vmatpush.msra.mxu0 %v311
    %499 = vmatpush.msra.mxu0 %v306
    %500 = vmatpush.msra.mxu0 %v301
    %501 = vmatpush.msra.mxu0 %v296
    %502 = vmatpush.msra.mxu0 %v291
    %503 = vmatpush.msra.mxu0 %v286
    %504 = vmatpush.msra.mxu0 %v281
    %505 = vmatmul.f32.gmra.mxu0 %v34
    %v506 = vpop.f32.mrf.mxu0
    %v507 = vadd.f32 %v484, %v506
    %508 = vmatmul.f32.gmra.mxu0 %v39
    %v509 = vpop.f32.mrf.mxu0
    %v510 = vadd.f32 %v487, %v509
    %511 = vdwg.mxu0
    %512 = vmatpush.msra.mxu0 0.0
    %513 = vmatpush.msra.mxu0 0.0
    %514 = vmatpush.msra.mxu0 0.0
    %515 = vmatpush.msra.mxu0 0.0
    %516 = vmatpush.msra.mxu0 0.0
    %517 = vmatpush.msra.mxu0 0.0
    %518 = vmatpush.msra.mxu0 0.0
    %519 = vmatpush.msra.mxu0 0.0
    %520 = vmatpush.msra.mxu0 %v396
    %521 = vmatpush.msra.mxu0 %v391
    %522 = vmatpush.msra.mxu0 %v386
    %523 = vmatpush.msra.mxu0 %v381
    %524 = vmatpush.msra.mxu0 %v376
    %525 = vmatpush.msra.mxu0 %v371
    %526 = vmatpush.msra.mxu0 %v366
    %527 = vmatpush.msra.mxu0 %v361
    %528 = vmatmul.f32.gmra.mxu0 %v415
    %v529 = vpop.f32.mrf.mxu0
    %v530 = vadd.f32 %v507, %v529
    %531 = vmatmul.f32.gmra.mxu0 %v418
    %v532 = vpop.f32.mrf.mxu0
    %v533 = vadd.f32 %v510, %v532
    %534 = vdwg.mxu0
    %535 = vmatpush.msra.mxu0 %v117
    %536 = vmatpush.msra.mxu0 %v112
    %537 = vmatpush.msra.mxu0 %v107
    %538 = vmatpush.msra.mxu0 %v102
    %539 = vmatpush.msra.mxu0 %v97
    %540 = vmatpush.msra.mxu0 %v92
    %541 = vmatpush.msra.mxu0 %v87
    %542 = vmatpush.msra.mxu0 %v82
    %543 = vmatpush.msra.mxu0 %v77
    %544 = vmatpush.msra.mxu0 %v72
    %545 = vmatpush.msra.mxu0 %v67
    %546 = vmatpush.msra.mxu0 %v62
    %547 = vmatpush.msra.mxu0 %v57
    %548 = vmatpush.msra.mxu0 %v52
    %549 = vmatpush.msra.mxu0 %v47
    %550 = vmatpush.msra.mxu0 %v42
    %551 = vmatmul.f32.gmra.mxu0 %v31
    %v552 = vpop.f32.mrf.mxu0
    %v553 = vadd.f32 %v404, %v552
    %554 = vmatmul.f32.gmra.mxu0 %v36
    %v555 = vpop.f32.mrf.mxu0
    %v556 = vadd.f32 %v404, %v555
    %557 = vdwg.mxu0
    %558 = vmatpush.msra.mxu0 %v197
    %559 = vmatpush.msra.mxu0 %v192
    %560 = vmatpush.msra.mxu0 %v187
    %561 = vmatpush.msra.mxu0 %v182
    %562 = vmatpush.msra.mxu0 %v177
    %563 = vmatpush.msra.mxu0 %v172
    %564 = vmatpush.msra.mxu0 %v167
    %565 = vmatpush.msra.mxu0 %v162
    %566 = vmatpush.msra.mxu0 %v157
    %567 = vmatpush.msra.mxu0 %v152
    %568 = vmatpush.msra.mxu0 %v147
    %569 = vmatpush.msra.mxu0 %v142
    %570 = vmatpush.msra.mxu0 %v137
    %571 = vmatpush.msra.mxu0 %v132
    %572 = vmatpush.msra.mxu0 %v127
    %573 = vmatpush.msra.mxu0 %v122
    %574 = vmatmul.f32.gmra.mxu0 %v32
    %v575 = vpop.f32.mrf.mxu0
    %v576 = vadd.f32 %v553, %v575
    %577 = vmatmul.f32.gmra.mxu0 %v37
    %v578 = vpop.f32.mrf.mxu0
    %v579 = vadd.f32 %v556, %v578
    %580 = vdwg.mxu0
    %581 = vmatpush.msra.mxu0 %v277
    %582 = vmatpush.msra.mxu0 %v272
    %583 = vmatpush.msra.mxu0 %v267
    %584 = vmatpush.msra.mxu0 %v262
    %585 = vmatpush.msra.mxu0 %v257
    %586 = vmatpush.msra.mxu0 %v252
    %587 = vmatpush.msra.mxu0 %v247
    %588 = vmatpush.msra.mxu0 %v242
    %589 = vmatpush.msra.mxu0 %v237
    %590 = vmatpush.msra.mxu0 %v232
    %591 = vmatpush.msra.mxu0 %v227
    %592 = vmatpush.msra.mxu0 %v222
    %593 = vmatpush.msra.mxu0 %v217
    %594 = vmatpush.msra.mxu0 %v212
    %595 = vmatpush.msra.mxu0 %v207
    %596 = vmatpush.msra.mxu0 %v202
    %597 = vmatmul.f32.gmra.mxu0 %v33
    %v598 = vpop.f32.mrf.mxu0
    %v599 = vadd.f32 %v576, %v598
    %600 = vmatmul.f32.gmra.mxu0 %v38
    %v601 = vpop.f32.mrf.mxu0
    %v602 = vadd.f32 %v579, %v601
    %603 = vdwg.mxu0
    %604 = vmatpush.msra.mxu0 %v357
    %605 = vmatpush.msra.mxu0 %v352
    %606 = vmatpush.msra.mxu0 %v347
    %607 = vmatpush.msra.mxu0 %v342
    %608 = vmatpush.msra.mxu0 %v337
    %609 = vmatpush.msra.mxu0 %v332
    %610 = vmatpush.msra.mxu0 %v327
    %611 = vmatpush.msra.mxu0 %v322
    %612 = vmatpush.msra.mxu0 %v317
    %613 = vmatpush.msra.mxu0 %v312
    %614 = vmatpush.msra.mxu0 %v307
    %615 = vmatpush.msra.mxu0 %v302
    %616 = vmatpush.msra.mxu0 %v297
    %617 = vmatpush.msra.mxu0 %v292
    %618 = vmatpush.msra.mxu0 %v287
    %619 = vmatpush.msra.mxu0 %v282
    %620 = vmatmul.f32.gmra.mxu0 %v34
    %v621 = vpop.f32.mrf.mxu0
    %v622 = vadd.f32 %v599, %v621
    %623 = vmatmul.f32.gmra.mxu0 %v39
    %v624 = vpop.f32.mrf.mxu0
    %v625 = vadd.f32 %v602, %v624
    %626 = vdwg.mxu0
    %627 = vmatpush.msra.mxu0 0.0
    %628 = vmatpush.msra.mxu0 0.0
    %629 = vmatpush.msra.mxu0 0.0
    %630 = vmatpush.msra.mxu0 0.0
    %631 = vmatpush.msra.mxu0 0.0
    %632 = vmatpush.msra.mxu0 0.0
    %633 = vmatpush.msra.mxu0 0.0
    %634 = vmatpush.msra.mxu0 0.0
    %635 = vmatpush.msra.mxu0 %v397
    %636 = vmatpush.msra.mxu0 %v392
    %637 = vmatpush.msra.mxu0 %v387
    %638 = vmatpush.msra.mxu0 %v382
    %639 = vmatpush.msra.mxu0 %v377
    %640 = vmatpush.msra.mxu0 %v372
    %641 = vmatpush.msra.mxu0 %v367
    %642 = vmatpush.msra.mxu0 %v362
    %643 = vmatmul.f32.gmra.mxu0 %v415
    %v644 = vpop.f32.mrf.mxu0
    %v645 = vadd.f32 %v622, %v644
    %646 = vmatmul.f32.gmra.mxu0 %v418
    %v647 = vpop.f32.mrf.mxu0
    %v648 = vadd.f32 %v625, %v647
    %649 = vdwg.mxu0
    %650 = vmatpush.msra.mxu0 %v118
    %651 = vmatpush.msra.mxu0 %v113
    %652 = vmatpush.msra.mxu0 %v108
    %653 = vmatpush.msra.mxu0 %v103
    %654 = vmatpush.msra.mxu0 %v98
    %655 = vmatpush.msra.mxu0 %v93
    %656 = vmatpush.msra.mxu0 %v88
    %657 = vmatpush.msra.mxu0 %v83
    %658 = vmatpush.msra.mxu0 %v78
    %659 = vmatpush.msra.mxu0 %v73
    %660 = vmatpush.msra.mxu0 %v68
    %661 = vmatpush.msra.mxu0 %v63
    %662 = vmatpush.msra.mxu0 %v58
    %663 = vmatpush.msra.mxu0 %v53
    %664 = vmatpush.msra.mxu0 %v48
    %665 = vmatpush.msra.mxu0 %v43
    %666 = vmatmul.f32.gmra.mxu0 %v31
    %v667 = vpop.f32.mrf.mxu0
    %v668 = vadd.f32 %v405, %v667
    %669 = vmatmul.f32.gmra.mxu0 %v36
    %v670 = vpop.f32.mrf.mxu0
    %v671 = vadd.f32 %v405, %v670
    %672 = vdwg.mxu0
    %673 = vmatpush.msra.mxu0 %v198
    %674 = vmatpush.msra.mxu0 %v193
    %675 = vmatpush.msra.mxu0 %v188
    %676 = vmatpush.msra.mxu0 %v183
    %677 = vmatpush.msra.mxu0 %v178
    %678 = vmatpush.msra.mxu0 %v173
    %679 = vmatpush.msra.mxu0 %v168
    %680 = vmatpush.msra.mxu0 %v163
    %681 = vmatpush.msra.mxu0 %v158
    %682 = vmatpush.msra.mxu0 %v153
    %683 = vmatpush.msra.mxu0 %v148
    %684 = vmatpush.msra.mxu0 %v143
    %685 = vmatpush.msra.mxu0 %v138
    %686 = vmatpush.msra.mxu0 %v133
    %687 = vmatpush.msra.mxu0 %v128
    %688 = vmatpush.msra.mxu0 %v123
    %689 = vmatmul.f32.gmra.mxu0 %v32
    %v690 = vpop.f32.mrf.mxu0
    %v691 = vadd.f32 %v668, %v690
    %692 = vmatmul.f32.gmra.mxu0 %v37
    %v693 = vpop.f32.mrf.mxu0
    %v694 = vadd.f32 %v671, %v693
    %695 = vdwg.mxu0
    %696 = vmatpush.msra.mxu0 %v278
    %697 = vmatpush.msra.mxu0 %v273
    %698 = vmatpush.msra.mxu0 %v268
    %699 = vmatpush.msra.mxu0 %v263
    %700 = vmatpush.msra.mxu0 %v258
    %701 = vmatpush.msra.mxu0 %v253
    %702 = vmatpush.msra.mxu0 %v248
    %703 = vmatpush.msra.mxu0 %v243
    %704 = vmatpush.msra.mxu0 %v238
    %705 = vmatpush.msra.mxu0 %v233
    %706 = vmatpush.msra.mxu0 %v228
    %707 = vmatpush.msra.mxu0 %v223
    %708 = vmatpush.msra.mxu0 %v218
    %709 = vmatpush.msra.mxu0 %v213
    %710 = vmatpush.msra.mxu0 %v208
    %711 = vmatpush.msra.mxu0 %v203
    %712 = vmatmul.f32.gmra.mxu0 %v33
    %v713 = vpop.f32.mrf.mxu0
    %v714 = vadd.f32 %v691, %v713
    %715 = vmatmul.f32.gmra.mxu0 %v38
    %v716 = vpop.f32.mrf.mxu0
    %v717 = vadd.f32 %v694, %v716
    %718 = vdwg.mxu0
    %719 = vmatpush.msra.mxu0 %v358
    %720 = vmatpush.msra.mxu0 %v353
    %721 = vmatpush.msra.mxu0 %v348
    %722 = vmatpush.msra.mxu0 %v343
    %723 = vmatpush.msra.mxu0 %v338
    %724 = vmatpush.msra.mxu0 %v333
    %725 = vmatpush.msra.mxu0 %v328
    %726 = vmatpush.msra.mxu0 %v323
    %727 = vmatpush.msra.mxu0 %v318
    %728 = vmatpush.msra.mxu0 %v313
    %729 = vmatpush.msra.mxu0 %v308
    %730 = vmatpush.msra.mxu0 %v303
    %731 = vmatpush.msra.mxu0 %v298
    %732 = vmatpush.msra.mxu0 %v293
    %733 = vmatpush.msra.mxu0 %v288
    %734 = vmatpush.msra.mxu0 %v283
    %735 = vmatmul.f32.gmra.mxu0 %v34
    %v736 = vpop.f32.mrf.mxu0
    %v737 = vadd.f32 %v714, %v736
    %738 = vmatmul.f32.gmra.mxu0 %v39
    %v739 = vpop.f32.mrf.mxu0
    %v740 = vadd.f32 %v717, %v739
    %741 = vdwg.mxu0
    %742 = vmatpush.msra.mxu0 0.0
    %743 = vmatpush.msra.mxu0 0.0
    %744 = vmatpush.msra.mxu0 0.0
    %745 = vmatpush.msra.mxu0 0.0
    %746 = vmatpush.msra.mxu0 0.0
    %747 = vmatpush.msra.mxu0 0.0
    %748 = vmatpush.msra.mxu0 0.0
    %749 = vmatpush.msra.mxu0 0.0
    %750 = vmatpush.msra.mxu0 %v398
    %751 = vmatpush.msra.mxu0 %v393
    %752 = vmatpush.msra.mxu0 %v388
    %753 = vmatpush.msra.mxu0 %v383
    %754 = vmatpush.msra.mxu0 %v378
    %755 = vmatpush.msra.mxu0 %v373
    %756 = vmatpush.msra.mxu0 %v368
    %757 = vmatpush.msra.mxu0 %v363
    %758 = vmatmul.f32.gmra.mxu0 %v415
    %v759 = vpop.f32.mrf.mxu0
    %v760 = vadd.f32 %v737, %v759
    %761 = vmatmul.f32.gmra.mxu0 %v418
    %v762 = vpop.f32.mrf.mxu0
    %v763 = vadd.f32 %v740, %v762
    %764 = vdwg.mxu0
    %765 = vmatpush.msra.mxu0 %v119
    %766 = vmatpush.msra.mxu0 %v114
    %767 = vmatpush.msra.mxu0 %v109
    %768 = vmatpush.msra.mxu0 %v104
    %769 = vmatpush.msra.mxu0 %v99
    %770 = vmatpush.msra.mxu0 %v94
    %771 = vmatpush.msra.mxu0 %v89
    %772 = vmatpush.msra.mxu0 %v84
    %773 = vmatpush.msra.mxu0 %v79
    %774 = vmatpush.msra.mxu0 %v74
    %775 = vmatpush.msra.mxu0 %v69
    %776 = vmatpush.msra.mxu0 %v64
    %777 = vmatpush.msra.mxu0 %v59
    %778 = vmatpush.msra.mxu0 %v54
    %779 = vmatpush.msra.mxu0 %v49
    %780 = vmatpush.msra.mxu0 %v44
    %781 = vmatmul.f32.gmra.mxu0 %v31
    %v782 = vpop.f32.mrf.mxu0
    %v783 = vadd.f32 %v406, %v782
    %784 = vmatmul.f32.gmra.mxu0 %v36
    %v785 = vpop.f32.mrf.mxu0
    %v786 = vadd.f32 %v406, %v785
    %787 = vdwg.mxu0
    %788 = vmatpush.msra.mxu0 %v199
    %789 = vmatpush.msra.mxu0 %v194
    %790 = vmatpush.msra.mxu0 %v189
    %791 = vmatpush.msra.mxu0 %v184
    %792 = vmatpush.msra.mxu0 %v179
    %793 = vmatpush.msra.mxu0 %v174
    %794 = vmatpush.msra.mxu0 %v169
    %795 = vmatpush.msra.mxu0 %v164
    %796 = vmatpush.msra.mxu0 %v159
    %797 = vmatpush.msra.mxu0 %v154
    %798 = vmatpush.msra.mxu0 %v149
    %799 = vmatpush.msra.mxu0 %v144
    %800 = vmatpush.msra.mxu0 %v139
    %801 = vmatpush.msra.mxu0 %v134
    %802 = vmatpush.msra.mxu0 %v129
    %803 = vmatpush.msra.mxu0 %v124
    %804 = vmatmul.f32.gmra.mxu0 %v32
    %v805 = vpop.f32.mrf.mxu0
    %v806 = vadd.f32 %v783, %v805
    %807 = vmatmul.f32.gmra.mxu0 %v37
    %v808 = vpop.f32.mrf.mxu0
    %v809 = vadd.f32 %v786, %v808
    %810 = vdwg.mxu0
    %811 = vmatpush.msra.mxu0 %v279
    %812 = vmatpush.msra.mxu0 %v274
    %813 = vmatpush.msra.mxu0 %v269
    %814 = vmatpush.msra.mxu0 %v264
    %815 = vmatpush.msra.mxu0 %v259
    %816 = vmatpush.msra.mxu0 %v254
    %817 = vmatpush.msra.mxu0 %v249
    %818 = vmatpush.msra.mxu0 %v244
    %819 = vmatpush.msra.mxu0 %v239
    %820 = vmatpush.msra.mxu0 %v234
    %821 = vmatpush.msra.mxu0 %v229
    %822 = vmatpush.msra.mxu0 %v224
    %823 = vmatpush.msra.mxu0 %v219
    %824 = vmatpush.msra.mxu0 %v214
    %825 = vmatpush.msra.mxu0 %v209
    %826 = vmatpush.msra.mxu0 %v204
    %827 = vmatmul.f32.gmra.mxu0 %v33
    %v828 = vpop.f32.mrf.mxu0
    %v829 = vadd.f32 %v806, %v828
    %830 = vmatmul.f32.gmra.mxu0 %v38
    %v831 = vpop.f32.mrf.mxu0
    %v832 = vadd.f32 %v809, %v831
    %833 = vdwg.mxu0
    %834 = vmatpush.msra.mxu0 %v359
    %835 = vmatpush.msra.mxu0 %v354
    %836 = vmatpush.msra.mxu0 %v349
    %837 = vmatpush.msra.mxu0 %v344
    %838 = vmatpush.msra.mxu0 %v339
    %839 = vmatpush.msra.mxu0 %v334
    %840 = vmatpush.msra.mxu0 %v329
    %841 = vmatpush.msra.mxu0 %v324
    %842 = vmatpush.msra.mxu0 %v319
    %843 = vmatpush.msra.mxu0 %v314
    %844 = vmatpush.msra.mxu0 %v309
    %845 = vmatpush.msra.mxu0 %v304
    %846 = vmatpush.msra.mxu0 %v299
    %847 = vmatpush.msra.mxu0 %v294
    %848 = vmatpush.msra.mxu0 %v289
    %849 = vmatpush.msra.mxu0 %v284
    %850 = vmatmul.f32.gmra.mxu0 %v34
    %v851 = vpop.f32.mrf.mxu0
    %v852 = vadd.f32 %v829, %v851
    %853 = vmatmul.f32.gmra.mxu0 %v39
    %v854 = vpop.f32.mrf.mxu0
    %v855 = vadd.f32 %v832, %v854
    %856 = vdwg.mxu0
    %857 = vmatpush.msra.mxu0 0.0
    %858 = vmatpush.msra.mxu0 0.0
    %859 = vmatpush.msra.mxu0 0.0
    %860 = vmatpush.msra.mxu0 0.0
    %861 = vmatpush.msra.mxu0 0.0
    %862 = vmatpush.msra.mxu0 0.0
    %863 = vmatpush.msra.mxu0 0.0
    %864 = vmatpush.msra.mxu0 0.0
    %865 = vmatpush.msra.mxu0 %v399
    %866 = vmatpush.msra.mxu0 %v394
    %867 = vmatpush.msra.mxu0 %v389
    %868 = vmatpush.msra.mxu0 %v384
    %869 = vmatpush.msra.mxu0 %v379
    %870 = vmatpush.msra.mxu0 %v374
    %871 = vmatpush.msra.mxu0 %v369
    %872 = vmatpush.msra.mxu0 %v364
    %873 = vmatmul.f32.gmra.mxu0 %v415
    %v874 = vpop.f32.mrf.mxu0
    %v875 = vadd.f32 %v852, %v874
    %876 = vmatmul.f32.gmra.mxu0 %v418
    %v877 = vpop.f32.mrf.mxu0
    %v878 = vadd.f32 %v855, %v877
    %879 = vdwg.mxu0
    %880 = vmatpush.msra.mxu0 %v120
    %881 = vmatpush.msra.mxu0 %v115
    %882 = vmatpush.msra.mxu0 %v110
    %883 = vmatpush.msra.mxu0 %v105
    %884 = vmatpush.msra.mxu0 %v100
    %885 = vmatpush.msra.mxu0 %v95
    %886 = vmatpush.msra.mxu0 %v90
    %887 = vmatpush.msra.mxu0 %v85
    %888 = vmatpush.msra.mxu0 %v80
    %889 = vmatpush.msra.mxu0 %v75
    %890 = vmatpush.msra.mxu0 %v70
    %891 = vmatpush.msra.mxu0 %v65
    %892 = vmatpush.msra.mxu0 %v60
    %893 = vmatpush.msra.mxu0 %v55
    %894 = vmatpush.msra.mxu0 %v50
    %895 = vmatpush.msra.mxu0 %v45
    %896 = vmatmul.f32.gmra.mxu0 %v31
    %v897 = vpop.f32.mrf.mxu0
    %v898 = vadd.f32 %v407, %v897
    %899 = vmatmul.f32.gmra.mxu0 %v36
    %v900 = vpop.f32.mrf.mxu0
    %v901 = vadd.f32 %v407, %v900
    %902 = vdwg.mxu0
    %903 = vmatpush.msra.mxu0 %v200
    %904 = vmatpush.msra.mxu0 %v195
    %905 = vmatpush.msra.mxu0 %v190
    %906 = vmatpush.msra.mxu0 %v185
    %907 = vmatpush.msra.mxu0 %v180
    %908 = vmatpush.msra.mxu0 %v175
    %909 = vmatpush.msra.mxu0 %v170
    %910 = vmatpush.msra.mxu0 %v165
    %911 = vmatpush.msra.mxu0 %v160
    %912 = vmatpush.msra.mxu0 %v155
    %913 = vmatpush.msra.mxu0 %v150
    %914 = vmatpush.msra.mxu0 %v145
    %915 = vmatpush.msra.mxu0 %v140
    %916 = vmatpush.msra.mxu0 %v135
    %917 = vmatpush.msra.mxu0 %v130
    %918 = vmatpush.msra.mxu0 %v125
    %919 = vmatmul.f32.gmra.mxu0 %v32
    %v920 = vpop.f32.mrf.mxu0
    %v921 = vadd.f32 %v898, %v920
    %922 = vmatmul.f32.gmra.mxu0 %v37
    %v923 = vpop.f32.mrf.mxu0
    %v924 = vadd.f32 %v901, %v923
    %925 = vdwg.mxu0
    %926 = vmatpush.msra.mxu0 %v280
    %927 = vmatpush.msra.mxu0 %v275
    %928 = vmatpush.msra.mxu0 %v270
    %929 = vmatpush.msra.mxu0 %v265
    %930 = vmatpush.msra.mxu0 %v260
    %931 = vmatpush.msra.mxu0 %v255
    %932 = vmatpush.msra.mxu0 %v250
    %933 = vmatpush.msra.mxu0 %v245
    %934 = vmatpush.msra.mxu0 %v240
    %935 = vmatpush.msra.mxu0 %v235
    %936 = vmatpush.msra.mxu0 %v230
    %937 = vmatpush.msra.mxu0 %v225
    %938 = vmatpush.msra.mxu0 %v220
    %939 = vmatpush.msra.mxu0 %v215
    %940 = vmatpush.msra.mxu0 %v210
    %941 = vmatpush.msra.mxu0 %v205
    %942 = vmatmul.f32.gmra.mxu0 %v33
    %v943 = vpop.f32.mrf.mxu0
    %v944 = vadd.f32 %v921, %v943
    %945 = vmatmul.f32.gmra.mxu0 %v38
    %v946 = vpop.f32.mrf.mxu0
    %v947 = vadd.f32 %v924, %v946
    %948 = vdwg.mxu0
    %949 = vmatpush.msra.mxu0 %v360
    %950 = vmatpush.msra.mxu0 %v355
    %951 = vmatpush.msra.mxu0 %v350
    %952 = vmatpush.msra.mxu0 %v345
    %953 = vmatpush.msra.mxu0 %v340
    %954 = vmatpush.msra.mxu0 %v335
    %955 = vmatpush.msra.mxu0 %v330
    %956 = vmatpush.msra.mxu0 %v325
    %957 = vmatpush.msra.mxu0 %v320
    %958 = vmatpush.msra.mxu0 %v315
    %959 = vmatpush.msra.mxu0 %v310
    %960 = vmatpush.msra.mxu0 %v305
    %961 = vmatpush.msra.mxu0 %v300
    %962 = vmatpush.msra.mxu0 %v295
    %963 = vmatpush.msra.mxu0 %v290
    %964 = vmatpush.msra.mxu0 %v285
    %965 = vmatmul.f32.gmra.mxu0 %v34
    %v966 = vpop.f32.mrf.mxu0
    %v967 = vadd.f32 %v944, %v966
    %968 = vmatmul.f32.gmra.mxu0 %v39
    %v969 = vpop.f32.mrf.mxu0
    %v970 = vadd.f32 %v947, %v969
    %971 = vdwg.mxu0
    %972 = vmatpush.msra.mxu0 0.0
    %973 = vmatpush.msra.mxu0 0.0
    %974 = vmatpush.msra.mxu0 0.0
    %975 = vmatpush.msra.mxu0 0.0
    %976 = vmatpush.msra.mxu0 0.0
    %977 = vmatpush.msra.mxu0 0.0
    %978 = vmatpush.msra.mxu0 0.0
    %979 = vmatpush.msra.mxu0 0.0
    %980 = vmatpush.msra.mxu0 %v400
    %981 = vmatpush.msra.mxu0 %v395
    %982 = vmatpush.msra.mxu0 %v390
    %983 = vmatpush.msra.mxu0 %v385
    %984 = vmatpush.msra.mxu0 %v380
    %985 = vmatpush.msra.mxu0 %v375
    %986 = vmatpush.msra.mxu0 %v370
    %987 = vmatpush.msra.mxu0 %v365
    %988 = vmatmul.f32.gmra.mxu0 %v415
    %v989 = vpop.f32.mrf.mxu0
    %v990 = vadd.f32 %v967, %v989
    %991 = vmatmul.f32.gmra.mxu0 %v418
    %v992 = vpop.f32.mrf.mxu0
    %v993 = vadd.f32 %v970, %v992
    %994 = vdwg.mxu0
    %995 = vst [vmem:[#allocation2] sm:$0xff] %v530
    %996 = vst [vmem:[#allocation2 + $0x8] sm:$0xff] %v645
    %997 = vst [vmem:[#allocation2 + $0x10] sm:$0xff] %v760
    %998 = vst [vmem:[#allocation2 + $0x18] sm:$0xff] %v875
    %999 = vst.msk [vmem:[#allocation2 + $0x20] sm:$0xff] %vm413, %v990
    %1000 = vst [vmem:[#allocation2 + $0x28] sm:$0xff] %v533
    %1001 = vst [vmem:[#allocation2 + $0x30] sm:$0xff] %v648
    %1002 = vst [vmem:[#allocation2 + $0x38] sm:$0xff] %v763
    %1003 = vst [vmem:[#allocation2 + $0x40] sm:$0xff] %v878
    %1004 = vst.msk [vmem:[#allocation2 + $0x48] sm:$0xff] %vm413, %v993
    %v1005 = vld [vmem:[%s2] sm:$0xff]
    %v1006 = vld [vmem:[%s2 + $0x8] sm:$0xff]
    %v1007 = vld [vmem:[%s2 + $0x10] sm:$0xff]
    %v1008 = vld [vmem:[%s2 + $0x18] sm:$0xff]
    %v1009 = vld [vmem:[%s2 + $0x20] sm:$0xff]
    %v1010 = vld [vmem:[%s2 + $0x28] sm:$0xff]
    %v1011 = vld [vmem:[%s2 + $0x30] sm:$0xff]
    %v1012 = vld [vmem:[%s2 + $0x38] sm:$0xff]
    %v1013 = vld [vmem:[%s2 + $0x40] sm:$0xff]
    %v1014 = vld [vmem:[%s2 + $0x48] sm:$0xff]
    %v1015 = vld [vmem:[%s2 + $0x50] sm:$0xff]
    %v1016 = vld [vmem:[%s2 + $0x58] sm:$0xff]
    %v1017 = vld [vmem:[%s2 + $0x60] sm:$0xff]
    %v1018 = vld [vmem:[%s2 + $0x68] sm:$0xff]
    %v1019 = vld [vmem:[%s2 + $0x70] sm:$0xff]
    %v1020 = vld [vmem:[%s2 + $0x78] sm:$0xff]
    %v1021 = vld [vmem:[%s2 + $0x80] sm:$0xff]
    %v1022 = vld [vmem:[%s2 + $0x88] sm:$0xff]
    %v1023 = vld [vmem:[%s2 + $0x90] sm:$0xff]
    %v1024 = vld [vmem:[%s2 + $0x98] sm:$0xff]
    %v1025 = vld [vmem:[%s2 + $0xa0] sm:$0xff]
    %v1026 = vld [vmem:[%s2 + $0xa8] sm:$0xff]
    %v1027 = vld [vmem:[%s2 + $0xb0] sm:$0xff]
    %v1028 = vld [vmem:[%s2 + $0xb8] sm:$0xff]
    %v1029 = vld [vmem:[%s2 + $0xc0] sm:$0xff]
    %v1030 = vld [vmem:[%s2 + $0xc8] sm:$0xff]
    %v1031 = vld [vmem:[%s2 + $0xd0] sm:$0xff]
    %v1032 = vld [vmem:[%s2 + $0xd8] sm:$0xff]
    %v1033 = vld [vmem:[%s2 + $0xe0] sm:$0xff]
    %v1034 = vld [vmem:[%s2 + $0xe8] sm:$0xff]
    %v1035 = vld [vmem:[%s2 + $0xf0] sm:$0xff]
    %v1036 = vld [vmem:[%s2 + $0xf8] sm:$0xff]
    %v1037 = vld [vmem:[%s2 + $0x100] sm:$0xff]
    %v1038 = vld [vmem:[%s2 + $0x108] sm:$0xff]
    %v1039 = vld [vmem:[%s2 + $0x110] sm:$0xff]
    %v1040 = vld [vmem:[%s2 + $0x118] sm:$0xff]
    %v1041 = vld [vmem:[%s2 + $0x120] sm:$0xff]
    %v1042 = vld [vmem:[%s2 + $0x128] sm:$0xff]
    %v1043 = vld [vmem:[%s2 + $0x130] sm:$0xff]
    %v1044 = vld [vmem:[%s2 + $0x138] sm:$0xff]
    %v1045 = vld [vmem:[%s2 + $0x140] sm:$0xff]
    %v1046 = vld [vmem:[%s2 + $0x148] sm:$0xff]
    %v1047 = vld [vmem:[%s2 + $0x150] sm:$0xff]
    %v1048 = vld [vmem:[%s2 + $0x158] sm:$0xff]
    %v1049 = vld [vmem:[%s2 + $0x160] sm:$0xff]
    %v1050 = vld [vmem:[%s2 + $0x168] sm:$0xff]
    %v1051 = vld [vmem:[%s2 + $0x170] sm:$0xff]
    %v1052 = vld [vmem:[%s2 + $0x178] sm:$0xff]
    %v1053 = vld [vmem:[%s2 + $0x180] sm:$0xff]
    %v1054 = vld [vmem:[%s2 + $0x188] sm:$0xff]
    %v1055 = vld [vmem:[%s2 + $0x190] sm:$0xff]
    %v1056 = vld [vmem:[%s2 + $0x198] sm:$0xff]
    %v1057 = vld [vmem:[%s2 + $0x1a0] sm:$0xff]
    %v1058 = vld [vmem:[%s2 + $0x1a8] sm:$0xff]
    %v1059 = vld [vmem:[%s2 + $0x1b0] sm:$0xff]
    %v1060 = vld [vmem:[%s2 + $0x1b8] sm:$0xff]
    %v1061 = vld [vmem:[%s2 + $0x1c0] sm:$0xff]
    %v1062 = vld [vmem:[%s2 + $0x1c8] sm:$0xff]
    %v1063 = vld [vmem:[%s2 + $0x1d0] sm:$0xff]
    %v1064 = vld [vmem:[%s2 + $0x1d8] sm:$0xff]
    %v1065 = vld [vmem:[%s2 + $0x1e0] sm:$0xff]
    %v1066 = vld [vmem:[%s2 + $0x1e8] sm:$0xff]
    %v1067 = vld [vmem:[%s2 + $0x1f0] sm:$0xff]
    %v1068 = vld [vmem:[%s2 + $0x1f8] sm:$0xff]
    %v1069 = vld [vmem:[%s2 + $0x200] sm:$0xff]
    %v1070 = vld [vmem:[%s2 + $0x208] sm:$0xff]
    %v1071 = vld [vmem:[%s2 + $0x210] sm:$0xff]
    %v1072 = vld [vmem:[%s2 + $0x218] sm:$0xff]
    %v1073 = vld [vmem:[%s2 + $0x220] sm:$0xff]
    %v1074 = vld [vmem:[%s2 + $0x228] sm:$0xff]
    %v1075 = vld [vmem:[%s2 + $0x230] sm:$0xff]
    %v1076 = vld [vmem:[%s2 + $0x238] sm:$0xff]
    %v1077 = vld [vmem:[%s2 + $0x240] sm:$0xff]
    %v1078 = vld [vmem:[%s2 + $0x248] sm:$0xff]
    %v1079 = vld [vmem:[%s2 + $0x250] sm:$0xff]
    %v1080 = vld [vmem:[%s2 + $0x258] sm:$0xff]
    %v1081 = vld [vmem:[%s2 + $0x260] sm:$0xff]
    %v1082 = vld [vmem:[%s2 + $0x268] sm:$0xff]
    %v1083 = vld [vmem:[%s2 + $0x270] sm:$0xff]
    %v1084 = vld [vmem:[%s2 + $0x278] sm:$0xff]
    %v1085 = vld [vmem:[%s2 + $0x280] sm:$0xff]
    %v1086 = vld [vmem:[%s2 + $0x288] sm:$0xff]
    %v1087 = vld [vmem:[%s2 + $0x290] sm:$0xff]
    %v1088 = vld [vmem:[%s2 + $0x298] sm:$0xff]
    %v1089 = vld [vmem:[%s2 + $0x2a0] sm:$0xff]
    %v1090 = vld [vmem:[%s2 + $0x2a8] sm:$0xff]
    %v1091 = vld [vmem:[%s2 + $0x2b0] sm:$0xff]
    %v1092 = vld [vmem:[%s2 + $0x2b8] sm:$0xff]
    %v1093 = vld [vmem:[%s2 + $0x2c0] sm:$0xff]
    %v1094 = vld [vmem:[%s2 + $0x2c8] sm:$0xff]
    %v1095 = vld [vmem:[%s2 + $0x2d0] sm:$0xff]
    %v1096 = vld [vmem:[%s2 + $0x2d8] sm:$0xff]
    %v1097 = vld [vmem:[%s2 + $0x2e0] sm:$0xff]
    %v1098 = vld [vmem:[%s2 + $0x2e8] sm:$0xff]
    %v1099 = vld [vmem:[%s2 + $0x2f0] sm:$0xff]
    %v1100 = vld [vmem:[%s2 + $0x2f8] sm:$0xff]
    %v1101 = vld [vmem:[%s2 + $0x300] sm:$0xff]
    %v1102 = vld [vmem:[%s2 + $0x308] sm:$0xff]
    %v1103 = vld [vmem:[%s2 + $0x310] sm:$0xff]
    %v1104 = vld [vmem:[%s2 + $0x318] sm:$0xff]
    %v1105 = vld [vmem:[%s2 + $0x320] sm:$0xff]
    %v1106 = vld [vmem:[%s2 + $0x328] sm:$0xff]
    %v1107 = vld [vmem:[%s2 + $0x330] sm:$0xff]
    %v1108 = vld [vmem:[%s2 + $0x338] sm:$0xff]
    %v1109 = vld [vmem:[%s2 + $0x340] sm:$0xff]
    %v1110 = vld [vmem:[%s2 + $0x348] sm:$0xff]
    %v1111 = vld [vmem:[%s2 + $0x350] sm:$0xff]
    %v1112 = vld [vmem:[%s2 + $0x358] sm:$0xff]
    %v1113 = vld [vmem:[%s2 + $0x360] sm:$0xff]
    %v1114 = vld [vmem:[%s2 + $0x368] sm:$0xff]
    %v1115 = vld [vmem:[%s2 + $0x370] sm:$0xff]
    %v1116 = vld [vmem:[%s2 + $0x378] sm:$0xff]
    %v1117 = vld [vmem:[%s2 + $0x380] sm:$0xff]
    %v1118 = vld [vmem:[%s2 + $0x388] sm:$0xff]
    %v1119 = vld [vmem:[%s2 + $0x390] sm:$0xff]
    %v1120 = vld [vmem:[%s2 + $0x398] sm:$0xff]
    %v1121 = vld [vmem:[%s2 + $0x3a0] sm:$0xff]
    %v1122 = vld [vmem:[%s2 + $0x3a8] sm:$0xff]
    %v1123 = vld [vmem:[%s2 + $0x3b0] sm:$0xff]
    %v1124 = vld [vmem:[%s2 + $0x3b8] sm:$0xff]
    %v1125 = vld [vmem:[%s2 + $0x3c0] sm:$0xff]
    %v1126 = vld [vmem:[%s2 + $0x3c8] sm:$0xff]
    %v1127 = vld [vmem:[%s2 + $0x3d0] sm:$0xff]
    %v1128 = vld [vmem:[%s2 + $0x3d8] sm:$0xff]
    %v1129 = vld [vmem:[%s2 + $0x3e0] sm:$0xff]
    %v1130 = vld [vmem:[%s2 + $0x3e8] sm:$0xff]
    %v1131 = vld [vmem:[%s2 + $0x3f0] sm:$0xff]
    %v1132 = vld [vmem:[%s2 + $0x3f8] sm:$0xff]
    %v1133 = vld [vmem:[%s2 + $0x400] sm:$0xff]
    %v1134 = vld [vmem:[%s2 + $0x408] sm:$0xff]
    %v1135 = vld [vmem:[%s2 + $0x410] sm:$0xff]
    %v1136 = vld [vmem:[%s2 + $0x418] sm:$0xff]
    %v1137 = vld [vmem:[%s2 + $0x420] sm:$0xff]
    %v1138 = vld [vmem:[%s2 + $0x428] sm:$0xff]
    %v1139 = vld [vmem:[%s2 + $0x430] sm:$0xff]
    %v1140 = vld [vmem:[%s2 + $0x438] sm:$0xff]
    %v1141 = vld [vmem:[%s2 + $0x440] sm:$0xff]
    %v1142 = vld [vmem:[%s2 + $0x448] sm:$0xff]
    %v1143 = vld [vmem:[%s2 + $0x450] sm:$0xff]
    %v1144 = vld [vmem:[%s2 + $0x458] sm:$0xff]
    %v1145 = vld [vmem:[%s2 + $0x460] sm:$0xff]
    %v1146 = vld [vmem:[%s2 + $0x468] sm:$0xff]
    %v1147 = vld [vmem:[%s2 + $0x470] sm:$0xff]
    %v1148 = vld [vmem:[%s2 + $0x478] sm:$0xff]
    %v1149 = vld [vmem:[%s5] sm:$0x3]
    %v1151 = vperm.slane %v1149, 0
    %v1152 = vperm.slane %v1149, 1
    %1155 = vmatpush.msra.mxu0 %v1035
    %1156 = vmatpush.msra.mxu0 %v1033
    %1157 = vmatpush.msra.mxu0 %v1031
    %1158 = vmatpush.msra.mxu0 %v1029
    %1159 = vmatpush.msra.mxu0 %v1027
    %1160 = vmatpush.msra.mxu0 %v1025
    %1161 = vmatpush.msra.mxu0 %v1023
    %1162 = vmatpush.msra.mxu0 %v1021
    %1163 = vmatpush.msra.mxu0 %v1019
    %1164 = vmatpush.msra.mxu0 %v1017
    %1165 = vmatpush.msra.mxu0 %v1015
    %1166 = vmatpush.msra.mxu0 %v1013
    %1167 = vmatpush.msra.mxu0 %v1011
    %1168 = vmatpush.msra.mxu0 %v1009
    %1169 = vmatpush.msra.mxu0 %v1007
    %1170 = vmatpush.msra.mxu0 %v1005
    %1171 = vmatmul.f32.gmra.mxu0 %v31
    %v1172 = vpop.f32.mrf.mxu0
    %v1173 = vadd.f32 %v1151, %v1172
    %1174 = vmatmul.f32.gmra.mxu0 %v36
    %v1175 = vpop.f32.mrf.mxu0
    %v1176 = vadd.f32 %v1151, %v1175
    %1177 = vdwg.mxu0
    %1178 = vmatpush.msra.mxu0 %v1067
    %1179 = vmatpush.msra.mxu0 %v1065
    %1180 = vmatpush.msra.mxu0 %v1063
    %1181 = vmatpush.msra.mxu0 %v1061
    %1182 = vmatpush.msra.mxu0 %v1059
    %1183 = vmatpush.msra.mxu0 %v1057
    %1184 = vmatpush.msra.mxu0 %v1055
    %1185 = vmatpush.msra.mxu0 %v1053
    %1186 = vmatpush.msra.mxu0 %v1051
    %1187 = vmatpush.msra.mxu0 %v1049
    %1188 = vmatpush.msra.mxu0 %v1047
    %1189 = vmatpush.msra.mxu0 %v1045
    %1190 = vmatpush.msra.mxu0 %v1043
    %1191 = vmatpush.msra.mxu0 %v1041
    %1192 = vmatpush.msra.mxu0 %v1039
    %1193 = vmatpush.msra.mxu0 %v1037
    %1194 = vmatmul.f32.gmra.mxu0 %v32
    %v1195 = vpop.f32.mrf.mxu0
    %v1196 = vadd.f32 %v1173, %v1195
    %1197 = vmatmul.f32.gmra.mxu0 %v37
    %v1198 = vpop.f32.mrf.mxu0
    %v1199 = vadd.f32 %v1176, %v1198
    %1200 = vdwg.mxu0
    %1201 = vmatpush.msra.mxu0 %v1099
    %1202 = vmatpush.msra.mxu0 %v1097
    %1203 = vmatpush.msra.mxu0 %v1095
    %1204 = vmatpush.msra.mxu0 %v1093
    %1205 = vmatpush.msra.mxu0 %v1091
    %1206 = vmatpush.msra.mxu0 %v1089
    %1207 = vmatpush.msra.mxu0 %v1087
    %1208 = vmatpush.msra.mxu0 %v1085
    %1209 = vmatpush.msra.mxu0 %v1083
    %1210 = vmatpush.msra.mxu0 %v1081
    %1211 = vmatpush.msra.mxu0 %v1079
    %1212 = vmatpush.msra.mxu0 %v1077
    %1213 = vmatpush.msra.mxu0 %v1075
    %1214 = vmatpush.msra.mxu0 %v1073
    %1215 = vmatpush.msra.mxu0 %v1071
    %1216 = vmatpush.msra.mxu0 %v1069
    %1217 = vmatmul.f32.gmra.mxu0 %v33
    %v1218 = vpop.f32.mrf.mxu0
    %v1219 = vadd.f32 %v1196, %v1218
    %1220 = vmatmul.f32.gmra.mxu0 %v38
    %v1221 = vpop.f32.mrf.mxu0
    %v1222 = vadd.f32 %v1199, %v1221
    %1223 = vdwg.mxu0
    %1224 = vmatpush.msra.mxu0 %v1131
    %1225 = vmatpush.msra.mxu0 %v1129
    %1226 = vmatpush.msra.mxu0 %v1127
    %1227 = vmatpush.msra.mxu0 %v1125
    %1228 = vmatpush.msra.mxu0 %v1123
    %1229 = vmatpush.msra.mxu0 %v1121
    %1230 = vmatpush.msra.mxu0 %v1119
    %1231 = vmatpush.msra.mxu0 %v1117
    %1232 = vmatpush.msra.mxu0 %v1115
    %1233 = vmatpush.msra.mxu0 %v1113
    %1234 = vmatpush.msra.mxu0 %v1111
    %1235 = vmatpush.msra.mxu0 %v1109
    %1236 = vmatpush.msra.mxu0 %v1107
    %1237 = vmatpush.msra.mxu0 %v1105
    %1238 = vmatpush.msra.mxu0 %v1103
    %1239 = vmatpush.msra.mxu0 %v1101
    %1240 = vmatmul.f32.gmra.mxu0 %v34
    %v1241 = vpop.f32.mrf.mxu0
    %v1242 = vadd.f32 %v1219, %v1241
    %1243 = vmatmul.f32.gmra.mxu0 %v39
    %v1244 = vpop.f32.mrf.mxu0
    %v1245 = vadd.f32 %v1222, %v1244
    %1246 = vdwg.mxu0
    %1247 = vmatpush.msra.mxu0 0.0
    %1248 = vmatpush.msra.mxu0 0.0
    %1249 = vmatpush.msra.mxu0 0.0
    %1250 = vmatpush.msra.mxu0 0.0
    %1251 = vmatpush.msra.mxu0 0.0
    %1252 = vmatpush.msra.mxu0 0.0
    %1253 = vmatpush.msra.mxu0 0.0
    %1254 = vmatpush.msra.mxu0 0.0
    %1255 = vmatpush.msra.mxu0 %v1147
    %1256 = vmatpush.msra.mxu0 %v1145
    %1257 = vmatpush.msra.mxu0 %v1143
    %1258 = vmatpush.msra.mxu0 %v1141
    %1259 = vmatpush.msra.mxu0 %v1139
    %1260 = vmatpush.msra.mxu0 %v1137
    %1261 = vmatpush.msra.mxu0 %v1135
    %1262 = vmatpush.msra.mxu0 %v1133
    %1263 = vmatmul.f32.gmra.mxu0 %v415
    %v1264 = vpop.f32.mrf.mxu0
    %v1265 = vadd.f32 %v1242, %v1264
    %1266 = vmatmul.f32.gmra.mxu0 %v418
    %v1267 = vpop.f32.mrf.mxu0
    %v1268 = vadd.f32 %v1245, %v1267
    %1269 = vdwg.mxu0
    %1270 = vmatpush.msra.mxu0 %v1036
    %1271 = vmatpush.msra.mxu0 %v1034
    %1272 = vmatpush.msra.mxu0 %v1032
    %1273 = vmatpush.msra.mxu0 %v1030
    %1274 = vmatpush.msra.mxu0 %v1028
    %1275 = vmatpush.msra.mxu0 %v1026
    %1276 = vmatpush.msra.mxu0 %v1024
    %1277 = vmatpush.msra.mxu0 %v1022
    %1278 = vmatpush.msra.mxu0 %v1020
    %1279 = vmatpush.msra.mxu0 %v1018
    %1280 = vmatpush.msra.mxu0 %v1016
    %1281 = vmatpush.msra.mxu0 %v1014
    %1282 = vmatpush.msra.mxu0 %v1012
    %1283 = vmatpush.msra.mxu0 %v1010
    %1284 = vmatpush.msra.mxu0 %v1008
    %1285 = vmatpush.msra.mxu0 %v1006
    %1286 = vmatmul.f32.gmra.mxu0 %v31
    %v1287 = vpop.f32.mrf.mxu0
    %v1288 = vadd.f32 %v1152, %v1287
    %1289 = vmatmul.f32.gmra.mxu0 %v36
    %v1290 = vpop.f32.mrf.mxu0
    %v1291 = vadd.f32 %v1152, %v1290
    %1292 = vdwg.mxu0
    %1293 = vmatpush.msra.mxu0 %v1068
    %1294 = vmatpush.msra.mxu0 %v1066
    %1295 = vmatpush.msra.mxu0 %v1064
    %1296 = vmatpush.msra.mxu0 %v1062
    %1297 = vmatpush.msra.mxu0 %v1060
    %1298 = vmatpush.msra.mxu0 %v1058
    %1299 = vmatpush.msra.mxu0 %v1056
    %1300 = vmatpush.msra.mxu0 %v1054
    %1301 = vmatpush.msra.mxu0 %v1052
    %1302 = vmatpush.msra.mxu0 %v1050
    %1303 = vmatpush.msra.mxu0 %v1048
    %1304 = vmatpush.msra.mxu0 %v1046
    %1305 = vmatpush.msra.mxu0 %v1044
    %1306 = vmatpush.msra.mxu0 %v1042
    %1307 = vmatpush.msra.mxu0 %v1040
    %1308 = vmatpush.msra.mxu0 %v1038
    %1309 = vmatmul.f32.gmra.mxu0 %v32
    %v1310 = vpop.f32.mrf.mxu0
    %v1311 = vadd.f32 %v1288, %v1310
    %1312 = vmatmul.f32.gmra.mxu0 %v37
    %v1313 = vpop.f32.mrf.mxu0
    %v1314 = vadd.f32 %v1291, %v1313
    %1315 = vdwg.mxu0
    %1316 = vmatpush.msra.mxu0 %v1100
    %1317 = vmatpush.msra.mxu0 %v1098
    %1318 = vmatpush.msra.mxu0 %v1096
    %1319 = vmatpush.msra.mxu0 %v1094
    %1320 = vmatpush.msra.mxu0 %v1092
    %1321 = vmatpush.msra.mxu0 %v1090
    %1322 = vmatpush.msra.mxu0 %v1088
    %1323 = vmatpush.msra.mxu0 %v1086
    %1324 = vmatpush.msra.mxu0 %v1084
    %1325 = vmatpush.msra.mxu0 %v1082
    %1326 = vmatpush.msra.mxu0 %v1080
    %1327 = vmatpush.msra.mxu0 %v1078
    %1328 = vmatpush.msra.mxu0 %v1076
    %1329 = vmatpush.msra.mxu0 %v1074
    %1330 = vmatpush.msra.mxu0 %v1072
    %1331 = vmatpush.msra.mxu0 %v1070
    %1332 = vmatmul.f32.gmra.mxu0 %v33
    %v1333 = vpop.f32.mrf.mxu0
    %v1334 = vadd.f32 %v1311, %v1333
    %1335 = vmatmul.f32.gmra.mxu0 %v38
    %v1336 = vpop.f32.mrf.mxu0
    %v1337 = vadd.f32 %v1314, %v1336
    %1338 = vdwg.mxu0
    %1339 = vmatpush.msra.mxu0 %v1132
    %1340 = vmatpush.msra.mxu0 %v1130
    %1341 = vmatpush.msra.mxu0 %v1128
    %1342 = vmatpush.msra.mxu0 %v1126
    %1343 = vmatpush.msra.mxu0 %v1124
    %1344 = vmatpush.msra.mxu0 %v1122
    %1345 = vmatpush.msra.mxu0 %v1120
    %1346 = vmatpush.msra.mxu0 %v1118
    %1347 = vmatpush.msra.mxu0 %v1116
    %1348 = vmatpush.msra.mxu0 %v1114
    %1349 = vmatpush.msra.mxu0 %v1112
    %1350 = vmatpush.msra.mxu0 %v1110
    %1351 = vmatpush.msra.mxu0 %v1108
    %1352 = vmatpush.msra.mxu0 %v1106
    %1353 = vmatpush.msra.mxu0 %v1104
    %1354 = vmatpush.msra.mxu0 %v1102
    %1355 = vmatmul.f32.gmra.mxu0 %v34
    %v1356 = vpop.f32.mrf.mxu0
    %v1357 = vadd.f32 %v1334, %v1356
    %1358 = vmatmul.f32.gmra.mxu0 %v39
    %v1359 = vpop.f32.mrf.mxu0
    %v1360 = vadd.f32 %v1337, %v1359
    %1361 = vdwg.mxu0
    %1362 = vmatpush.msra.mxu0 0.0
    %1363 = vmatpush.msra.mxu0 0.0
    %1364 = vmatpush.msra.mxu0 0.0
    %1365 = vmatpush.msra.mxu0 0.0
    %1366 = vmatpush.msra.mxu0 0.0
    %1367 = vmatpush.msra.mxu0 0.0
    %1368 = vmatpush.msra.mxu0 0.0
    %1369 = vmatpush.msra.mxu0 0.0
    %1370 = vmatpush.msra.mxu0 %v1148
    %1371 = vmatpush.msra.mxu0 %v1146
    %1372 = vmatpush.msra.mxu0 %v1144
    %1373 = vmatpush.msra.mxu0 %v1142
    %1374 = vmatpush.msra.mxu0 %v1140
    %1375 = vmatpush.msra.mxu0 %v1138
    %1376 = vmatpush.msra.mxu0 %v1136
    %1377 = vmatpush.msra.mxu0 %v1134
    %1378 = vmatmul.f32.gmra.mxu0 %v415
    %v1379 = vpop.f32.mrf.mxu0
    %v1380 = vadd.f32 %v1357, %v1379
    %1381 = vmatmul.f32.gmra.mxu0 %v418
    %v1382 = vpop.f32.mrf.mxu0
    %v1383 = vadd.f32 %v1360, %v1382
    %1384 = vdwg.mxu0
    %1385 = vst [vmem:[#allocation4] sm:$0xff] %v1265
    %1386 = vst.msk [vmem:[#allocation4 + $0x8] sm:$0xff] %vm413, %v1380
    %1387 = vst [vmem:[#allocation4 + $0x10] sm:$0xff] %v1268
    %1388 = vst.msk [vmem:[#allocation4 + $0x18] sm:$0xff] %vm413, %v1383
    %v1389 = vld [vmem:[%s3] sm:$0xff]
    %v1390 = vld [vmem:[%s3 + $0x8] sm:$0xff]
    %v1391 = vld [vmem:[%s3 + $0x10] sm:$0xff]
    %v1392 = vld [vmem:[%s3 + $0x18] sm:$0xff]
    %v1393 = vld [vmem:[%s3 + $0x20] sm:$0xff]
    %v1394 = vld [vmem:[%s3 + $0x28] sm:$0xff]
    %v1395 = vld [vmem:[%s3 + $0x30] sm:$0xff]
    %v1396 = vld [vmem:[%s3 + $0x38] sm:$0xff]
    %v1397 = vld [vmem:[%s3 + $0x40] sm:$0xff]
    %v1398 = vld [vmem:[%s3 + $0x48] sm:$0xff]
    %v1399 = vld [vmem:[%s3 + $0x50] sm:$0xff]
    %v1400 = vld [vmem:[%s3 + $0x58] sm:$0xff]
    %v1401 = vld [vmem:[%s3 + $0x60] sm:$0xff]
    %v1402 = vld [vmem:[%s3 + $0x68] sm:$0xff]
    %v1403 = vld [vmem:[%s3 + $0x70] sm:$0xff]
    %v1404 = vld [vmem:[%s3 + $0x78] sm:$0xff]
    %v1405 = vld [vmem:[%s3 + $0x80] sm:$0xff]
    %v1406 = vld [vmem:[%s3 + $0x88] sm:$0xff]
    %v1407 = vld [vmem:[%s3 + $0x90] sm:$0xff]
    %v1408 = vld [vmem:[%s3 + $0x98] sm:$0xff]
    %v1409 = vld [vmem:[%s3 + $0xa0] sm:$0xff]
    %v1410 = vld [vmem:[%s3 + $0xa8] sm:$0xff]
    %v1411 = vld [vmem:[%s3 + $0xb0] sm:$0xff]
    %v1412 = vld [vmem:[%s3 + $0xb8] sm:$0xff]
    %v1413 = vld [vmem:[%s3 + $0xc0] sm:$0xff]
    %v1414 = vld [vmem:[%s3 + $0xc8] sm:$0xff]
    %v1415 = vld [vmem:[%s3 + $0xd0] sm:$0xff]
    %v1416 = vld [vmem:[%s3 + $0xd8] sm:$0xff]
    %v1417 = vld [vmem:[%s3 + $0xe0] sm:$0xff]
    %v1418 = vld [vmem:[%s3 + $0xe8] sm:$0xff]
    %v1419 = vld [vmem:[%s3 + $0xf0] sm:$0xff]
    %v1420 = vld [vmem:[%s3 + $0xf8] sm:$0xff]
    %v1421 = vld [vmem:[%s3 + $0x100] sm:$0xff]
    %v1422 = vld [vmem:[%s3 + $0x108] sm:$0xff]
    %v1423 = vld [vmem:[%s3 + $0x110] sm:$0xff]
    %v1424 = vld [vmem:[%s3 + $0x118] sm:$0xff]
    %v1425 = vld [vmem:[%s3 + $0x120] sm:$0xff]
    %v1426 = vld [vmem:[%s3 + $0x128] sm:$0xff]
    %v1427 = vld [vmem:[%s3 + $0x130] sm:$0xff]
    %v1428 = vld [vmem:[%s3 + $0x138] sm:$0xff]
    %v1429 = vld [vmem:[%s3 + $0x140] sm:$0xff]
    %v1430 = vld [vmem:[%s3 + $0x148] sm:$0xff]
    %v1431 = vld [vmem:[%s3 + $0x150] sm:$0xff]
    %v1432 = vld [vmem:[%s3 + $0x158] sm:$0xff]
    %v1433 = vld [vmem:[%s3 + $0x160] sm:$0xff]
    %v1434 = vld [vmem:[%s3 + $0x168] sm:$0xff]
    %v1435 = vld [vmem:[%s3 + $0x170] sm:$0xff]
    %v1436 = vld [vmem:[%s3 + $0x178] sm:$0xff]
    %v1437 = vld [vmem:[%s3 + $0x180] sm:$0xff]
    %v1438 = vld [vmem:[%s3 + $0x188] sm:$0xff]
    %v1439 = vld [vmem:[%s3 + $0x190] sm:$0xff]
    %v1440 = vld [vmem:[%s3 + $0x198] sm:$0xff]
    %v1441 = vld [vmem:[%s3 + $0x1a0] sm:$0xff]
    %v1442 = vld [vmem:[%s3 + $0x1a8] sm:$0xff]
    %v1443 = vld [vmem:[%s3 + $0x1b0] sm:$0xff]
    %v1444 = vld [vmem:[%s3 + $0x1b8] sm:$0xff]
    %v1445 = vld [vmem:[%s3 + $0x1c0] sm:$0xff]
    %v1446 = vld [vmem:[%s3 + $0x1c8] sm:$0xff]
    %v1447 = vld [vmem:[%s3 + $0x1d0] sm:$0xff]
    %v1448 = vld [vmem:[%s3 + $0x1d8] sm:$0xff]
    %v1449 = vld [vmem:[%s3 + $0x1e0] sm:$0xff]
    %v1450 = vld [vmem:[%s3 + $0x1e8] sm:$0xff]
    %v1451 = vld [vmem:[%s3 + $0x1f0] sm:$0xff]
    %v1452 = vld [vmem:[%s3 + $0x1f8] sm:$0xff]
    %v1453 = vld [vmem:[%s3 + $0x200] sm:$0xff]
    %v1454 = vld [vmem:[%s3 + $0x208] sm:$0xff]
    %v1455 = vld [vmem:[%s3 + $0x210] sm:$0xff]
    %v1456 = vld [vmem:[%s3 + $0x218] sm:$0xff]
    %v1457 = vld [vmem:[%s3 + $0x220] sm:$0xff]
    %v1458 = vld [vmem:[%s3 + $0x228] sm:$0xff]
    %v1459 = vld [vmem:[%s3 + $0x230] sm:$0xff]
    %v1460 = vld [vmem:[%s3 + $0x238] sm:$0xff]
    %v1461 = vld [vmem:[%s3 + $0x240] sm:$0xff]
    %v1462 = vld [vmem:[%s3 + $0x248] sm:$0xff]
    %v1463 = vld [vmem:[%s3 + $0x250] sm:$0xff]
    %v1464 = vld [vmem:[%s3 + $0x258] sm:$0xff]
    %v1465 = vld [vmem:[%s3 + $0x260] sm:$0xff]
    %v1466 = vld [vmem:[%s3 + $0x268] sm:$0xff]
    %v1467 = vld [vmem:[%s3 + $0x270] sm:$0xff]
    %v1468 = vld [vmem:[%s3 + $0x278] sm:$0xff]
    %v1469 = vld [vmem:[%s3 + $0x280] sm:$0xff]
    %v1470 = vld [vmem:[%s3 + $0x288] sm:$0xff]
    %v1471 = vld [vmem:[%s3 + $0x290] sm:$0xff]
    %v1472 = vld [vmem:[%s3 + $0x298] sm:$0xff]
    %v1473 = vld [vmem:[%s3 + $0x2a0] sm:$0xff]
    %v1474 = vld [vmem:[%s3 + $0x2a8] sm:$0xff]
    %v1475 = vld [vmem:[%s3 + $0x2b0] sm:$0xff]
    %v1476 = vld [vmem:[%s3 + $0x2b8] sm:$0xff]
    %v1477 = vld [vmem:[%s3 + $0x2c0] sm:$0xff]
    %v1478 = vld [vmem:[%s3 + $0x2c8] sm:$0xff]
    %v1479 = vld [vmem:[%s3 + $0x2d0] sm:$0xff]
    %v1480 = vld [vmem:[%s3 + $0x2d8] sm:$0xff]
    %v1481 = vld [vmem:[%s3 + $0x2e0] sm:$0xff]
    %v1482 = vld [vmem:[%s3 + $0x2e8] sm:$0xff]
    %v1483 = vld [vmem:[%s3 + $0x2f0] sm:$0xff]
    %v1484 = vld [vmem:[%s3 + $0x2f8] sm:$0xff]
    %v1485 = vld [vmem:[%s3 + $0x300] sm:$0xff]
    %v1486 = vld [vmem:[%s3 + $0x308] sm:$0xff]
    %v1487 = vld [vmem:[%s3 + $0x310] sm:$0xff]
    %v1488 = vld [vmem:[%s3 + $0x318] sm:$0xff]
    %v1489 = vld [vmem:[%s3 + $0x320] sm:$0xff]
    %v1490 = vld [vmem:[%s3 + $0x328] sm:$0xff]
    %v1491 = vld [vmem:[%s3 + $0x330] sm:$0xff]
    %v1492 = vld [vmem:[%s3 + $0x338] sm:$0xff]
    %v1493 = vld [vmem:[%s3 + $0x340] sm:$0xff]
    %v1494 = vld [vmem:[%s3 + $0x348] sm:$0xff]
    %v1495 = vld [vmem:[%s3 + $0x350] sm:$0xff]
    %v1496 = vld [vmem:[%s3 + $0x358] sm:$0xff]
    %v1497 = vld [vmem:[%s3 + $0x360] sm:$0xff]
    %v1498 = vld [vmem:[%s3 + $0x368] sm:$0xff]
    %v1499 = vld [vmem:[%s3 + $0x370] sm:$0xff]
    %v1500 = vld [vmem:[%s3 + $0x378] sm:$0xff]
    %v1501 = vld [vmem:[%s3 + $0x380] sm:$0xff]
    %v1502 = vld [vmem:[%s3 + $0x388] sm:$0xff]
    %v1503 = vld [vmem:[%s3 + $0x390] sm:$0xff]
    %v1504 = vld [vmem:[%s3 + $0x398] sm:$0xff]
    %v1505 = vld [vmem:[%s3 + $0x3a0] sm:$0xff]
    %v1506 = vld [vmem:[%s3 + $0x3a8] sm:$0xff]
    %v1507 = vld [vmem:[%s3 + $0x3b0] sm:$0xff]
    %v1508 = vld [vmem:[%s3 + $0x3b8] sm:$0xff]
    %v1509 = vld [vmem:[%s3 + $0x3c0] sm:$0xff]
    %v1510 = vld [vmem:[%s3 + $0x3c8] sm:$0xff]
    %v1511 = vld [vmem:[%s3 + $0x3d0] sm:$0xff]
    %v1512 = vld [vmem:[%s3 + $0x3d8] sm:$0xff]
    %v1513 = vld [vmem:[%s3 + $0x3e0] sm:$0xff]
    %v1514 = vld [vmem:[%s3 + $0x3e8] sm:$0xff]
    %v1515 = vld [vmem:[%s3 + $0x3f0] sm:$0xff]
    %v1516 = vld [vmem:[%s3 + $0x3f8] sm:$0xff]
    %v1517 = vld [vmem:[%s3 + $0x400] sm:$0xff]
    %v1518 = vld [vmem:[%s3 + $0x408] sm:$0xff]
    %v1519 = vld [vmem:[%s3 + $0x410] sm:$0xff]
    %v1520 = vld [vmem:[%s3 + $0x418] sm:$0xff]
    %v1521 = vld [vmem:[%s3 + $0x420] sm:$0xff]
    %v1522 = vld [vmem:[%s3 + $0x428] sm:$0xff]
    %v1523 = vld [vmem:[%s3 + $0x430] sm:$0xff]
    %v1524 = vld [vmem:[%s3 + $0x438] sm:$0xff]
    %v1525 = vld [vmem:[%s3 + $0x440] sm:$0xff]
    %v1526 = vld [vmem:[%s3 + $0x448] sm:$0xff]
    %v1527 = vld [vmem:[%s3 + $0x450] sm:$0xff]
    %v1528 = vld [vmem:[%s3 + $0x458] sm:$0xff]
    %v1529 = vld [vmem:[%s3 + $0x460] sm:$0xff]
    %v1530 = vld [vmem:[%s3 + $0x468] sm:$0xff]
    %v1531 = vld [vmem:[%s3 + $0x470] sm:$0xff]
    %v1532 = vld [vmem:[%s3 + $0x478] sm:$0xff]
    %v1533 = vld [vmem:[%s6] sm:$0x3]
    %v1535 = vperm.slane %v1533, 0
    %v1536 = vperm.slane %v1533, 1
    %1539 = vmatpush.msra.mxu0 %v1419
    %1540 = vmatpush.msra.mxu0 %v1417
    %1541 = vmatpush.msra.mxu0 %v1415
    %1542 = vmatpush.msra.mxu0 %v1413
    %1543 = vmatpush.msra.mxu0 %v1411
    %1544 = vmatpush.msra.mxu0 %v1409
    %1545 = vmatpush.msra.mxu0 %v1407
    %1546 = vmatpush.msra.mxu0 %v1405
    %1547 = vmatpush.msra.mxu0 %v1403
    %1548 = vmatpush.msra.mxu0 %v1401
    %1549 = vmatpush.msra.mxu0 %v1399
    %1550 = vmatpush.msra.mxu0 %v1397
    %1551 = vmatpush.msra.mxu0 %v1395
    %1552 = vmatpush.msra.mxu0 %v1393
    %1553 = vmatpush.msra.mxu0 %v1391
    %1554 = vmatpush.msra.mxu0 %v1389
    %1555 = vmatmul.f32.gmra.mxu0 %v31
    %v1556 = vpop.f32.mrf.mxu0
    %v1557 = vadd.f32 %v1535, %v1556
    %1558 = vmatmul.f32.gmra.mxu0 %v36
    %v1559 = vpop.f32.mrf.mxu0
    %v1560 = vadd.f32 %v1535, %v1559
    %1561 = vdwg.mxu0
    %1562 = vmatpush.msra.mxu0 %v1451
    %1563 = vmatpush.msra.mxu0 %v1449
    %1564 = vmatpush.msra.mxu0 %v1447
    %1565 = vmatpush.msra.mxu0 %v1445
    %1566 = vmatpush.msra.mxu0 %v1443
    %1567 = vmatpush.msra.mxu0 %v1441
    %1568 = vmatpush.msra.mxu0 %v1439
    %1569 = vmatpush.msra.mxu0 %v1437
    %1570 = vmatpush.msra.mxu0 %v1435
    %1571 = vmatpush.msra.mxu0 %v1433
    %1572 = vmatpush.msra.mxu0 %v1431
    %1573 = vmatpush.msra.mxu0 %v1429
    %1574 = vmatpush.msra.mxu0 %v1427
    %1575 = vmatpush.msra.mxu0 %v1425
    %1576 = vmatpush.msra.mxu0 %v1423
    %1577 = vmatpush.msra.mxu0 %v1421
    %1578 = vmatmul.f32.gmra.mxu0 %v32
    %v1579 = vpop.f32.mrf.mxu0
    %v1580 = vadd.f32 %v1557, %v1579
    %1581 = vmatmul.f32.gmra.mxu0 %v37
    %v1582 = vpop.f32.mrf.mxu0
    %v1583 = vadd.f32 %v1560, %v1582
    %1584 = vdwg.mxu0
    %1585 = vmatpush.msra.mxu0 %v1483
    %1586 = vmatpush.msra.mxu0 %v1481
    %1587 = vmatpush.msra.mxu0 %v1479
    %1588 = vmatpush.msra.mxu0 %v1477
    %1589 = vmatpush.msra.mxu0 %v1475
    %1590 = vmatpush.msra.mxu0 %v1473
    %1591 = vmatpush.msra.mxu0 %v1471
    %1592 = vmatpush.msra.mxu0 %v1469
    %1593 = vmatpush.msra.mxu0 %v1467
    %1594 = vmatpush.msra.mxu0 %v1465
    %1595 = vmatpush.msra.mxu0 %v1463
    %1596 = vmatpush.msra.mxu0 %v1461
    %1597 = vmatpush.msra.mxu0 %v1459
    %1598 = vmatpush.msra.mxu0 %v1457
    %1599 = vmatpush.msra.mxu0 %v1455
    %1600 = vmatpush.msra.mxu0 %v1453
    %1601 = vmatmul.f32.gmra.mxu0 %v33
    %v1602 = vpop.f32.mrf.mxu0
    %v1603 = vadd.f32 %v1580, %v1602
    %1604 = vmatmul.f32.gmra.mxu0 %v38
    %v1605 = vpop.f32.mrf.mxu0
    %v1606 = vadd.f32 %v1583, %v1605
    %1607 = vdwg.mxu0
    %1608 = vmatpush.msra.mxu0 %v1515
    %1609 = vmatpush.msra.mxu0 %v1513
    %1610 = vmatpush.msra.mxu0 %v1511
    %1611 = vmatpush.msra.mxu0 %v1509
    %1612 = vmatpush.msra.mxu0 %v1507
    %1613 = vmatpush.msra.mxu0 %v1505
    %1614 = vmatpush.msra.mxu0 %v1503
    %1615 = vmatpush.msra.mxu0 %v1501
    %1616 = vmatpush.msra.mxu0 %v1499
    %1617 = vmatpush.msra.mxu0 %v1497
    %1618 = vmatpush.msra.mxu0 %v1495
    %1619 = vmatpush.msra.mxu0 %v1493
    %1620 = vmatpush.msra.mxu0 %v1491
    %1621 = vmatpush.msra.mxu0 %v1489
    %1622 = vmatpush.msra.mxu0 %v1487
    %1623 = vmatpush.msra.mxu0 %v1485
    %1624 = vmatmul.f32.gmra.mxu0 %v34
    %v1625 = vpop.f32.mrf.mxu0
    %v1626 = vadd.f32 %v1603, %v1625
    %1627 = vmatmul.f32.gmra.mxu0 %v39
    %v1628 = vpop.f32.mrf.mxu0
    %v1629 = vadd.f32 %v1606, %v1628
    %1630 = vdwg.mxu0
    %1631 = vmatpush.msra.mxu0 0.0
    %1632 = vmatpush.msra.mxu0 0.0
    %1633 = vmatpush.msra.mxu0 0.0
    %1634 = vmatpush.msra.mxu0 0.0
    %1635 = vmatpush.msra.mxu0 0.0
    %1636 = vmatpush.msra.mxu0 0.0
    %1637 = vmatpush.msra.mxu0 0.0
    %1638 = vmatpush.msra.mxu0 0.0
    %1639 = vmatpush.msra.mxu0 %v1531
    %1640 = vmatpush.msra.mxu0 %v1529
    %1641 = vmatpush.msra.mxu0 %v1527
    %1642 = vmatpush.msra.mxu0 %v1525
    %1643 = vmatpush.msra.mxu0 %v1523
    %1644 = vmatpush.msra.mxu0 %v1521
    %1645 = vmatpush.msra.mxu0 %v1519
    %1646 = vmatpush.msra.mxu0 %v1517
    %1647 = vmatmul.f32.gmra.mxu0 %v415
    %v1648 = vpop.f32.mrf.mxu0
    %v1649 = vadd.f32 %v1626, %v1648
    %1650 = vmatmul.f32.gmra.mxu0 %v418
    %v1651 = vpop.f32.mrf.mxu0
    %v1652 = vadd.f32 %v1629, %v1651
    %1653 = vdwg.mxu0
    %1654 = vmatpush.msra.mxu0 %v1420
    %1655 = vmatpush.msra.mxu0 %v1418
    %1656 = vmatpush.msra.mxu0 %v1416
    %1657 = vmatpush.msra.mxu0 %v1414
    %1658 = vmatpush.msra.mxu0 %v1412
    %1659 = vmatpush.msra.mxu0 %v1410
    %1660 = vmatpush.msra.mxu0 %v1408
    %1661 = vmatpush.msra.mxu0 %v1406
    %1662 = vmatpush.msra.mxu0 %v1404
    %1663 = vmatpush.msra.mxu0 %v1402
    %1664 = vmatpush.msra.mxu0 %v1400
    %1665 = vmatpush.msra.mxu0 %v1398
    %1666 = vmatpush.msra.mxu0 %v1396
    %1667 = vmatpush.msra.mxu0 %v1394
    %1668 = vmatpush.msra.mxu0 %v1392
    %1669 = vmatpush.msra.mxu0 %v1390
    %1670 = vmatmul.f32.gmra.mxu0 %v31
    %v1671 = vpop.f32.mrf.mxu0
    %v1672 = vadd.f32 %v1536, %v1671
    %1673 = vmatmul.f32.gmra.mxu0 %v36
    %v1674 = vpop.f32.mrf.mxu0
    %v1675 = vadd.f32 %v1536, %v1674
    %1676 = vdwg.mxu0
    %1677 = vmatpush.msra.mxu0 %v1452
    %1678 = vmatpush.msra.mxu0 %v1450
    %1679 = vmatpush.msra.mxu0 %v1448
    %1680 = vmatpush.msra.mxu0 %v1446
    %1681 = vmatpush.msra.mxu0 %v1444
    %1682 = vmatpush.msra.mxu0 %v1442
    %1683 = vmatpush.msra.mxu0 %v1440
    %1684 = vmatpush.msra.mxu0 %v1438
    %1685 = vmatpush.msra.mxu0 %v1436
    %1686 = vmatpush.msra.mxu0 %v1434
    %1687 = vmatpush.msra.mxu0 %v1432
    %1688 = vmatpush.msra.mxu0 %v1430
    %1689 = vmatpush.msra.mxu0 %v1428
    %1690 = vmatpush.msra.mxu0 %v1426
    %1691 = vmatpush.msra.mxu0 %v1424
    %1692 = vmatpush.msra.mxu0 %v1422
    %1693 = vmatmul.f32.gmra.mxu0 %v32
    %v1694 = vpop.f32.mrf.mxu0
    %v1695 = vadd.f32 %v1672, %v1694
    %1696 = vmatmul.f32.gmra.mxu0 %v37
    %v1697 = vpop.f32.mrf.mxu0
    %v1698 = vadd.f32 %v1675, %v1697
    %1699 = vdwg.mxu0
    %1700 = vmatpush.msra.mxu0 %v1484
    %1701 = vmatpush.msra.mxu0 %v1482
    %1702 = vmatpush.msra.mxu0 %v1480
    %1703 = vmatpush.msra.mxu0 %v1478
    %1704 = vmatpush.msra.mxu0 %v1476
    %1705 = vmatpush.msra.mxu0 %v1474
    %1706 = vmatpush.msra.mxu0 %v1472
    %1707 = vmatpush.msra.mxu0 %v1470
    %1708 = vmatpush.msra.mxu0 %v1468
    %1709 = vmatpush.msra.mxu0 %v1466
    %1710 = vmatpush.msra.mxu0 %v1464
    %1711 = vmatpush.msra.mxu0 %v1462
    %1712 = vmatpush.msra.mxu0 %v1460
    %1713 = vmatpush.msra.mxu0 %v1458
    %1714 = vmatpush.msra.mxu0 %v1456
    %1715 = vmatpush.msra.mxu0 %v1454
    %1716 = vmatmul.f32.gmra.mxu0 %v33
    %v1717 = vpop.f32.mrf.mxu0
    %v1718 = vadd.f32 %v1695, %v1717
    %1719 = vmatmul.f32.gmra.mxu0 %v38
    %v1720 = vpop.f32.mrf.mxu0
    %v1721 = vadd.f32 %v1698, %v1720
    %1722 = vdwg.mxu0
    %1723 = vmatpush.msra.mxu0 %v1516
    %1724 = vmatpush.msra.mxu0 %v1514
    %1725 = vmatpush.msra.mxu0 %v1512
    %1726 = vmatpush.msra.mxu0 %v1510
    %1727 = vmatpush.msra.mxu0 %v1508
    %1728 = vmatpush.msra.mxu0 %v1506
    %1729 = vmatpush.msra.mxu0 %v1504
    %1730 = vmatpush.msra.mxu0 %v1502
    %1731 = vmatpush.msra.mxu0 %v1500
    %1732 = vmatpush.msra.mxu0 %v1498
    %1733 = vmatpush.msra.mxu0 %v1496
    %1734 = vmatpush.msra.mxu0 %v1494
    %1735 = vmatpush.msra.mxu0 %v1492
    %1736 = vmatpush.msra.mxu0 %v1490
    %1737 = vmatpush.msra.mxu0 %v1488
    %1738 = vmatpush.msra.mxu0 %v1486
    %1739 = vmatmul.f32.gmra.mxu0 %v34
    %v1740 = vpop.f32.mrf.mxu0
    %v1741 = vadd.f32 %v1718, %v1740
    %1742 = vmatmul.f32.gmra.mxu0 %v39
    %v1743 = vpop.f32.mrf.mxu0
    %v1744 = vadd.f32 %v1721, %v1743
    %1745 = vdwg.mxu0
    %1746 = vmatpush.msra.mxu0 0.0
    %1747 = vmatpush.msra.mxu0 0.0
    %1748 = vmatpush.msra.mxu0 0.0
    %1749 = vmatpush.msra.mxu0 0.0
    %1750 = vmatpush.msra.mxu0 0.0
    %1751 = vmatpush.msra.mxu0 0.0
    %1752 = vmatpush.msra.mxu0 0.0
    %1753 = vmatpush.msra.mxu0 0.0
    %1754 = vmatpush.msra.mxu0 %v1532
    %1755 = vmatpush.msra.mxu0 %v1530
    %1756 = vmatpush.msra.mxu0 %v1528
    %1757 = vmatpush.msra.mxu0 %v1526
    %1758 = vmatpush.msra.mxu0 %v1524
    %1759 = vmatpush.msra.mxu0 %v1522
    %1760 = vmatpush.msra.mxu0 %v1520
    %1761 = vmatpush.msra.mxu0 %v1518
    %1762 = vmatmul.f32.gmra.mxu0 %v415
    %v1763 = vpop.f32.mrf.mxu0
    %v1764 = vadd.f32 %v1741, %v1763
    %1765 = vmatmul.f32.gmra.mxu0 %v418
    %v1766 = vpop.f32.mrf.mxu0
    %v1767 = vadd.f32 %v1744, %v1766
    %1768 = vdwg.mxu0
    %1769 = vst [vmem:[#allocation6] sm:$0xff] %v1649
    %1770 = vst.msk [vmem:[#allocation6 + $0x8] sm:$0xff] %vm413, %v1764
    %1771 = vst [vmem:[#allocation6 + $0x10] sm:$0xff] %v1652
    %1772 = vst.msk [vmem:[#allocation6 + $0x18] sm:$0xff] %vm413, %v1767
    // Predicated region
    $region30: #{tpu_custom_call.1} parent=1 // pred_check
      _
    $region31: #{tpu_custom_call.1} parent=1 // pred_check_branch
      %1774 = sbr.rel (0) target = $region33
    $region32: #{tpu_custom_call.1} parent=1 // pred_region
      %1776 = vsyncadd [#allocation3], 0
      %s1777 = sshll.u32 [#allocation2], 4
      %s1778 = int_to_ptr.vmem [resolvable:$true] %s1777
      %s1779 = sshll.u32 %s7, 4
      %s1780 = int_to_ptr.hbm [resolvable:$true] %s1779
      %1785 = dma.vmem_to_hbm [thread:$0]  %s1778, 1280, %s1780, [#allocation3], 640, 640, 40
    $region33: #{tpu_custom_call.1} parent=1 // pred_fallthru
      _
    // Predicated region
    $region34: #{tpu_custom_call.1} parent=1 // pred_check
      _
    $region35: #{tpu_custom_call.1} parent=1 // pred_check_branch
      %1787 = sbr.rel (0) target = $region37
    $region36: #{tpu_custom_call.1} parent=1 // pred_region
      %1789 = vsyncadd [#allocation5], 0
      %s1790 = sshll.u32 [#allocation4], 4
      %s1791 = int_to_ptr.vmem [resolvable:$true] %s1790
      %s1792 = sshll.u32 %s8, 4
      %s1793 = int_to_ptr.hbm [resolvable:$true] %s1792
      %1798 = dma.vmem_to_hbm [thread:$0]  %s1791, 512, %s1793, [#allocation5], 256, 256, 16
    $region37: #{tpu_custom_call.1} parent=1 // pred_fallthru
      _
    // Predicated region
    $region38: #{tpu_custom_call.1} parent=1 // pred_check
      _
    $region39: #{tpu_custom_call.1} parent=1 // pred_check_branch
      %1800 = sbr.rel (0) target = $region41
    $region40: #{tpu_custom_call.1} parent=1 // pred_region
      %1802 = vsyncadd [#allocation5], 0
      %s1803 = sshll.u32 [#allocation6], 4
      %s1804 = int_to_ptr.vmem [resolvable:$true] %s1803
      %s1805 = sshll.u32 %s9, 4
      %s1806 = int_to_ptr.hbm [resolvable:$true] %s1805
      %1811 = dma.vmem_to_hbm [thread:$0]  %s1804, 512, %s1806, [#allocation5], 256, 256, 16
    $region41: #{tpu_custom_call.1} parent=1 // pred_fallthru
      _
    // Predicated region
    $region42: #{tpu_custom_call.1} parent=1 // pred_check
      _
    $region43: #{tpu_custom_call.1} parent=1 // pred_check_branch
      %1813 = sbr.rel (0) target = $region45
    $region44: #{tpu_custom_call.1} parent=1 // pred_region
      %1815 = dma.done [#allocation3], 1280
    $region45: #{tpu_custom_call.1} parent=1 // pred_fallthru
      _
    // Predicated region
    $region46: #{tpu_custom_call.1} parent=1 // pred_check
      _
    $region47: #{tpu_custom_call.1} parent=1 // pred_check_branch
      %1817 = sbr.rel (0) target = $region49
    $region48: #{tpu_custom_call.1} parent=1 // pred_region
      %1819 = dma.done [#allocation5], 512
    $region49: #{tpu_custom_call.1} parent=1 // pred_fallthru
      _
    // Predicated region
    $region50: #{tpu_custom_call.1} parent=1 // pred_check
      _
    $region51: #{tpu_custom_call.1} parent=1 // pred_check_branch
      %1821 = sbr.rel (0) target = $region53
    $region52: #{tpu_custom_call.1} parent=1 // pred_region
      %1823 = dma.done [#allocation5], 512
    $region53: #{tpu_custom_call.1} parent=1 // pred_fallthru
      _
    %1824 = vsyncpa [#allocation3], 1
    %1825 = vsyncpa [#allocation5], 1

</llo_original>
